<compile_context>
chip_gen: v7x
topology: tpu7x:2x2x1
jax: 0.10.0
libtpu: 0.0.40
codegen_flags: <defaults>
</compile_context>

<pallas_src>
import jax
import jax.numpy as jnp
from jax import lax
from jax.experimental import pallas as pl
from jax.experimental.pallas import tpu as pltpu


LPAD = 8  # sublane-aligned start column of the padded-scratch interior
PARAM_ORDER = ('w1', 't1', 'w2', 't2', 'w3', 't3')


# ----------------------------------------------------------------------------
# Kernel
# ----------------------------------------------------------------------------
def make_bottleneck_kernel(H, W, Ho, Wo, TRo, TRin, stride, has_proj, cdtype,
                           lpad, num_row_tiles):
    """One (batch, row-tile) grid step.  TRo output rows per step, TRin input rows
    (= stride*(TRo-1)+3, includes the 1-row conv2 halo on each side)."""
    has_bottom_pad = (stride * (Ho - 1) + 2 == H + 1)   # last tile touches bottom zero row
    w_even = (W == Wo * stride)

    def kernel(x_ref, w1_ref, t1_ref, w2_ref, t2_ref, w3_ref, t3_ref,
               o_ref, pad_ref):
        Cin = x_ref.shape[-1]
        P = w1_ref.shape[1]
        Cout = w3_ref.shape[1]
        t = pl.program_id(1)
        in0 = pl.multiple_of(t * (TRo * stride), TRo * stride)

        # ---- conv1 (1x1) + BN1 + ReLU over this tile's rows (incl. halo) -----------
        xw = x_ref[pl.ds(in0, TRin), :, :]                        # (TRin, W, Cin)
        out1 = jnp.dot(xw.reshape(TRin * W, Cin).astype(cdtype), w1_ref[...],
                       preferred_element_type=jnp.float32) + t1_ref[...]
        out1 = jnp.maximum(out1, 0.0).astype(cdtype)              # cast once for scratch

        # ---- fill padded scratch (matmul dtype, interior sublane-aligned) ----------
        pad_ref[:, lpad:lpad + W, :] = out1.reshape(TRin, W, P)
        pad_ref[:, lpad - 1:lpad, :] = jnp.zeros((TRin, 1, P), cdtype)
        pad_ref[:, lpad + W:lpad + W + 2, :] = jnp.zeros((TRin, 2, P), cdtype)
        # Top / bottom conv2 zero-padding rows (only the first / last row tile reads them).
        @pl.when(t == 0)
        def _():
            pad_ref[0:1, lpad - 1:lpad + W + 2, :] = jnp.zeros((1, W + 3, P), cdtype)
        if has_bottom_pad:
            @pl.when(t == num_row_tiles - 1)
            def _():
                pad_ref[TRin - 1:TRin, lpad - 1:lpad + W + 2, :] = (
                    jnp.zeros((1, W + 3, P), cdtype))

        # ---- conv2 (3x3, pad=1, stride) + BN2 + ReLU: one im2col matmul, K = 9P -----
        taps = []
        if stride == 1:
            padv = pad_ref[...]                                   # (TRin, Wp, P)
            for di in range(3):
                rows = padv[di:di + TRo]                          # (TRo, Wp, P)
                for dj in range(3):
                    c0 = lpad - 1 + dj
                    taps.append(rows[:, c0:c0 + Wo, :])
        else:
            for di in range(3):
                # stride only on the row axis; columns read contiguously, de-interleaved.
                rows = pad_ref[pl.ds(di, TRo, stride=stride), :, :]
                for dj in range(3):
                    c0 = lpad - 1 + dj
                    slab = rows[:, c0:c0 + stride * Wo, :]
                    taps.append(slab.reshape(TRo, Wo, stride, P)[:, :, 0, :])
        patch = jnp.concatenate(taps, axis=-1).reshape(TRo * Wo, 9 * P)
        out2 = jnp.dot(patch, w2_ref[...],
                       preferred_element_type=jnp.float32) + t2_ref[...]
        out2 = jnp.maximum(out2, 0.0)                             # (TRo*Wo, P) f32

        # ---- conv3 (1x1) + BN3 (+ fused projection shortcut) + residual + ReLU -----
        if has_proj:
            if stride == 1:
                xs = x_ref[pl.ds(in0 + 1, TRo), :, :]             # (TRo, W=Wo, Cin)
            else:
                xr = x_ref[pl.ds(in0 + 1, TRo, stride=stride), :, :]   # (TRo, W, Cin)
                if w_even:
                    xs = xr.reshape(TRo, Wo, stride, Cin)[:, :, 0, :]
                else:
                    main = xr[:, :stride * (Wo - 1), :].reshape(
                        TRo, Wo - 1, stride, Cin)[:, :, 0, :]
                    last = xr[:, stride * (Wo - 1):stride * (Wo - 1) + 1, :]
                    xs = jnp.concatenate([main, last], axis=1)
            lhs = jnp.concatenate(
                [out2.astype(cdtype), xs.reshape(TRo * Wo, Cin).astype(cdtype)],
                axis=-1)                                          # K = P + Cin
            out3 = jnp.dot(lhs, w3_ref[...],
                           preferred_element_type=jnp.float32) + t3_ref[...]
        else:
            out3 = jnp.dot(out2.astype(cdtype), w3_ref[...],
                           preferred_element_type=jnp.float32) + t3_ref[...]
            xs = x_ref[pl.ds(in0 + 1, TRo), :, :]                 # identity shortcut
            out3 = out3 + xs.reshape(TRo * Wo, Cin).astype(jnp.float32)

        out = jnp.maximum(out3, 0.0)
        o_ref[...] = out.reshape(TRo, Wo, Cout).astype(o_ref.dtype)

    return kernel


# ----------------------------------------------------------------------------
# Wrappers
# ----------------------------------------------------------------------------
def _pick_row_tile(ho, target=8):
    best = 1
    for d in range(1, ho + 1):
        if ho % d == 0 and d <= target:
            best = d
    return best


def bottleneck_forward_nhwc(x, kparams, *, stride=1, has_proj=True,
                            matmul_dtype=jnp.bfloat16, out_dtype=None,
                            row_tile=None):
    """x: (N, H, W, Cin).  Preferred entry point: keep activations NHWC end-to-end."""
    N, H, W, Cin = x.shape
    P = kparams['w1'].shape[1]
    Cout = kparams['w3'].shape[1]
    Ho = (H - 1) // stride + 1
    Wo = (W - 1) // stride + 1
    if not has_proj:
        assert stride == 1 and Cin == Cout, (
            "identity shortcut requires stride == 1 and in_planes == expansion*planes")
    TRo = _pick_row_tile(Ho) if row_tile is None else row_tile
    assert Ho % TRo == 0, (Ho, TRo)
    num_row_tiles = Ho // TRo
    TRin = stride * (TRo - 1) + 3
    if out_dtype is None:
        out_dtype = x.dtype

    # Zero-pad H by one row on each side (conv2's vertical padding).  The kernel
    # overwrites the corresponding scratch rows with exact zeros, so conv1's bias/BN
    # on the padded rows never leaks into the result.
    xp = jnp.pad(x, ((0, 0), (1, 1), (0, 0), (0, 0)))

    args = [xp]
    in_specs = [pl.BlockSpec((None, H + 2, W, Cin), lambda n, t: (n, 0, 0, 0))]
    for name in PARAM_ORDER:
        arr = kparams[name]
        arr = (arr.astype(matmul_dtype) if name.startswith('w')
               else arr.astype(jnp.float32))        # folded shifts stay f32
        args.append(arr)
        # Grid-invariant operands: block index never changes, so they are DMA'd once.
        in_specs.append(pl.BlockSpec(arr.shape, lambda n, t, _nd=arr.ndim: (0,) * _nd))

    kernel = make_bottleneck_kernel(H, W, Ho, Wo, TRo, TRin, stride, has_proj,
                                    matmul_dtype, LPAD, num_row_tiles)

    out = pl.pallas_call(
        kernel,
        out_shape=jax.ShapeDtypeStruct((N, Ho, Wo, Cout), out_dtype),
        grid_spec=pltpu.PrefetchScalarGridSpec(
            num_scalar_prefetch=0,
            grid=(N, num_row_tiles),
            in_specs=in_specs,
            out_specs=pl.BlockSpec((None, TRo, Wo, Cout), lambda n, t: (n, t, 0, 0)),
            scratch_shapes=[pltpu.VMEM((TRin, LPAD + W + 2, P), matmul_dtype)],
        ),
        compiler_params=pltpu.CompilerParams(
            dimension_semantics=("parallel", "parallel"),
            vmem_limit_bytes=64 * 1024 * 1024),
    )(*args)
    return out


def bottleneck_forward(x_nchw, kparams, *, stride=1, has_proj=True,
                       matmul_dtype=jnp.bfloat16, out_dtype=None, row_tile=None):
    """NCHW adapter matching the PyTorch interface.  NOTE: in a full network, keep
    activations NHWC and call bottleneck_forward_nhwc directly -- these transposes are
    full-tensor HBM round trips per block."""
    x = jnp.transpose(x_nchw, (0, 2, 3, 1))
    out = bottleneck_forward_nhwc(x, kparams, stride=stride, has_proj=has_proj,
                                  matmul_dtype=matmul_dtype, out_dtype=out_dtype,
                                  row_tile=row_tile)
    return jnp.transpose(out, (0, 3, 1, 2))


# ----------------------------------------------------------------------------
# Deterministic parameter construction (mirrors nn.Conv2d / nn.BatchNorm2d shapes)
# ----------------------------------------------------------------------------
def make_torch_like_params(key, in_planes, planes, stride):
    exp = 2
    ks = jax.random.split(key, 24)
    it = iter(ks)

    def conv_w(cout, cin, kh, kw):
        bound = 1.0 / (cin * kh * kw) ** 0.5
        return jax.random.uniform(next(it), (cout, cin, kh, kw), jnp.float32, -bound, bound)

    def conv_b(cout, fan_in):
        bound = 1.0 / fan_in ** 0.5
        return jax.random.uniform(next(it), (cout,), jnp.float32, -bound, bound)

    def bn(c):
        gamma = jax.random.uniform(next(it), (c,), jnp.float32, 0.5, 1.5)
        beta = 0.1 * jax.random.normal(next(it), (c,), jnp.float32)
        mean = 0.1 * jax.random.normal(next(it), (c,), jnp.float32)
        var = jax.random.uniform(next(it), (c,), jnp.float32, 0.5, 1.5)
        return (gamma, beta, mean, var)

    has_proj = (stride != 1) or (in_planes != exp * planes)
    tp = {
        'w1': conv_w(planes, in_planes, 1, 1), 'b1': conv_b(planes, in_planes),
        'bn1': bn(planes),
        'w2': conv_w(planes, planes, 3, 3), 'b2': conv_b(planes, planes * 9),
        'bn2': bn(planes),
        'w3': conv_w(exp * planes, planes, 1, 1), 'b3': conv_b(exp * planes, planes),
        'bn3': bn(exp * planes),
        'has_proj': has_proj,
    }
    if has_proj:
        tp['wsc'] = conv_w(exp * planes, in_planes, 1, 1)
        tp['bsc'] = conv_b(exp * planes, in_planes)
        tp['bnsc'] = bn(exp * planes)
    return tp


def fold_for_kernel(tp):
    """Fold conv bias + eval-mode BN into matmul weights / per-channel shifts.
    Note: per-channel scaling folded before a bf16 cast does not change the *relative*
    quantization error of the weights; bf16 matmul error is validated in the test."""
    eps = 1e-5

    def fold_bn(bn_params):
        g, beta, m, v = bn_params
        scale = g / jnp.sqrt(v + eps)
        return scale, beta - m * scale

    kp = {}
    s1, sh1 = fold_bn(tp['bn1'])
    kp['w1'] = tp['w1'][:, :, 0, 0].T * s1[None, :]                          # (Cin, P)
    kp['t1'] = (tp['b1'] * s1 + sh1)[None, :]

    s2, sh2 = fold_bn(tp['bn2'])
    P = tp['w2'].shape[0]
    w2 = jnp.transpose(tp['w2'], (2, 3, 1, 0)) * s2[None, None, None, :]     # (3,3,P,P)
    kp['w2'] = w2.reshape(9 * P, P)                                          # im2col order
    kp['t2'] = (tp['b2'] * s2 + sh2)[None, :]

    s3, sh3 = fold_bn(tp['bn3'])
    w3 = tp['w3'][:, :, 0, 0].T * s3[None, :]                                # (P, 2P)
    t3 = (tp['b3'] * s3 + sh3)[None, :]
    if tp['has_proj']:
        ss, shs = fold_bn(tp['bnsc'])
        wsc = tp['wsc'][:, :, 0, 0].T * ss[None, :]                          # (Cin, 2P)
        tsc = (tp['bsc'] * ss + shs)[None, :]
        kp['w3'] = jnp.concatenate([w3, wsc], axis=0)                        # (P+Cin, 2P)
        kp['t3'] = t3 + tsc
    else:
        kp['w3'] = w3
        kp['t3'] = t3
    return kp


# ----------------------------------------------------------------------------
# Pure-JAX reference (NCHW, mirrors the PyTorch forward in eval mode)
# ----------------------------------------------------------------------------
def ref_forward(x, tp, stride):
    eps = 1e-5

    def conv(x, w, b, s=1, p=0):
        y = lax.conv_general_dilated(x, w, (s, s), [(p, p), (p, p)],
                                     dimension_numbers=('NCHW', 'OIHW', 'NCHW'))
        return y + b[None, :, None, None]

    def bn(x, params):
        g, b, m, v = params
        return ((x - m[None, :, None, None]) / jnp.sqrt(v[None, :, None, None] + eps)
                * g[None, :, None, None] + b[None, :, None, None])

    out = jax.nn.relu(bn(conv(x, tp['w1'], tp['b1']), tp['bn1']))
    out = jax.nn.relu(bn(conv(out, tp['w2'], tp['b2'], s=stride, p=1), tp['bn2']))
    out = bn(conv(out, tp['w3'], tp['b3']), tp['bn3'])
    if tp['has_proj']:
        sc = bn(conv(x, tp['wsc'], tp['bsc'], s=stride), tp['bnsc'])
    else:
        sc = x
    return jax.nn.relu(out + sc)


if __name__ == "__main__":
    key = jax.random.PRNGKey(0)
    N = 2

    # (in_planes, planes, stride, H, W, row_tile)
    configs = [
        (4, 4, 1, 16, 16, None),   # projection shortcut, 2 row tiles
        (8, 4, 1, 16, 16, None),   # identity shortcut
        (4, 4, 2, 16, 16, 4),      # strided projection shortcut, 2 row tiles
        (4, 4, 2, 15, 15, 4),      # odd spatial size (ragged W, bottom-pad row path)
    ]

    for idx, (in_planes, planes, stride, H, W, row_tile) in enumerate(configs):
        k_x, k_p = jax.random.split(jax.random.fold_in(key, idx))
        x = jax.random.normal(k_x, (N, in_planes, H, W), jnp.float32)
        tp = make_torch_like_params(k_p, in_planes, planes, stride)
        kp = fold_for_kernel(tp)

        ref = jax.block_until_ready(ref_forward(x, tp, stride))
        out = jax.block_until_ready(
            bottleneck_forward(x, kp, stride=stride, has_proj=tp['has_proj'],
                               matmul_dtype=jnp.float32, row_tile=row_tile))
        Ho = (H - 1) // stride + 1
        Wo = (W - 1) // stride + 1
        assert out.shape == ref.shape == (N, 2 * planes, Ho, Wo), (out.shape, ref.shape)
        err = float(jnp.max(jnp.abs(out - ref)))
        assert err < 1e-3, f"f32 config {idx}: max abs err {err}"

    # bf16 MXU-operand path (recommended on v5e/v6e/v7x); element-wise math stays f32.
    in_planes, planes, stride, H, W = 4, 4, 1, 16, 16
    k_x, k_p = jax.random.split(jax.random.fold_in(key, 100))
    x = jax.random.normal(k_x, (N, in_planes, H, W), jnp.float32)
    tp = make_torch_like_params(k_p, in_planes, planes, stride)
    kp = fold_for_kernel(tp)
    ref = jax.block_until_ready(ref_forward(x, tp, stride))
    out = jax.block_until_ready(
        bottleneck_forward(x, kp, stride=stride, has_proj=tp['has_proj'],
                           matmul_dtype=jnp.bfloat16))
    err = float(jnp.max(jnp.abs(out - ref)))
    assert err < 0.2, f"bf16: max abs err {err}"

    print("KERNEL_OK")
</pallas_src>

<mosaic_0001>
module attributes {stable_mosaic.version = 11 : i64} {
  func.func @kernel(%arg0: i32, %arg1: i32, %arg2: memref<1x18x16x4xf32, #tpu.memory_space<vmem>>, %arg3: memref<4x4xf32, #tpu.memory_space<vmem>>, %arg4: memref<1x4xf32, #tpu.memory_space<vmem>>, %arg5: memref<36x4xf32, #tpu.memory_space<vmem>>, %arg6: memref<1x4xf32, #tpu.memory_space<vmem>>, %arg7: memref<8x8xf32, #tpu.memory_space<vmem>>, %arg8: memref<1x8xf32, #tpu.memory_space<vmem>>, %arg9: memref<1x8x16x8xf32, #tpu.memory_space<vmem>>, %arg10: memref<10x26x4xf32, #tpu.memory_space<vmem>>) attributes {dimension_semantics = [#tpu.dimension_semantics<parallel>, #tpu.dimension_semantics<parallel>], iteration_bounds = array<i64: 2, 2>, scalar_prefetch = 0 : i64, scratch_operands = 1 : i64, tpu.core_type = #tpu.core_type<tc>, window_params = [{transform_indices = @transform_0, window_bounds = array<i64: 1, 18, 16, 4>}, {pipeline_mode = #tpu.pipeline_mode<synchronous>, transform_indices = @transform_1, window_bounds = array<i64: 4, 4>}, {pipeline_mode = #tpu.pipeline_mode<synchronous>, transform_indices = @transform_2, window_bounds = array<i64: 1, 4>}, {pipeline_mode = #tpu.pipeline_mode<synchronous>, transform_indices = @transform_3, window_bounds = array<i64: 36, 4>}, {pipeline_mode = #tpu.pipeline_mode<synchronous>, transform_indices = @transform_4, window_bounds = array<i64: 1, 4>}, {pipeline_mode = #tpu.pipeline_mode<synchronous>, transform_indices = @transform_5, window_bounds = array<i64: 8, 8>}, {pipeline_mode = #tpu.pipeline_mode<synchronous>, transform_indices = @transform_6, window_bounds = array<i64: 1, 8>}, {transform_indices = @transform_7, window_bounds = array<i64: 1, 8, 16, 8>}]} {
    %c8_i32 = arith.constant 8 : i32
    %0 = arith.muli %arg1, %c8_i32 : i32
    %1 = tpu.assume_multiple %0, 8 : i32
    %c0 = arith.constant 0 : index
    %2 = arith.index_cast %1 : i32 to index
    %c0_0 = arith.constant 0 : index
    %c0_1 = arith.constant 0 : index
    %3 = vector.load %arg2[%c0, %2, %c0_0, %c0_1] : memref<1x18x16x4xf32, #tpu.memory_space<vmem>>, vector<1x10x16x4xf32>
    %4 = vector.shape_cast %3 : vector<1x10x16x4xf32> to vector<10x16x4xf32>
    %5 = vector.shape_cast %4 : vector<10x16x4xf32> to vector<160x4xf32>
    %c0_2 = arith.constant 0 : index
    %c0_3 = arith.constant 0 : index
    %6 = vector.load %arg3[%c0_2, %c0_3] : memref<4x4xf32, #tpu.memory_space<vmem>>, vector<4x4xf32>
    %cst = arith.constant dense<0.000000e+00> : vector<160x4xf32>
    %7 = tpu.matmul %5, %6, %cst {dimension_numbers = #tpu.dot_dimension_numbers<[1], [0], [0], [1], [0, 0, 1, 1], [], []>} : vector<160x4xf32>, vector<4x4xf32>, vector<160x4xf32> -> vector<160x4xf32>
    %c0_4 = arith.constant 0 : index
    %c0_5 = arith.constant 0 : index
    %8 = vector.load %arg4[%c0_4, %c0_5] : memref<1x4xf32, #tpu.memory_space<vmem>>, vector<1x4xf32>
    %9 = vector.broadcast %8 : vector<1x4xf32> to vector<160x4xf32>
    %10 = arith.addf %7, %9 : vector<160x4xf32>
    %cst_6 = arith.constant 0.000000e+00 : f32
    %11 = vector.broadcast %cst_6 : f32 to vector<160x4xf32>
    %12 = arith.maximumf %10, %11 : vector<160x4xf32>
    %13 = vector.shape_cast %12 : vector<160x4xf32> to vector<10x16x4xf32>
    %c0_7 = arith.constant 0 : index
    %c8 = arith.constant 8 : index
    %c0_8 = arith.constant 0 : index
    %14 = vector.load %arg10[%c0_7, %c8, %c0_8] : memref<10x26x4xf32, #tpu.memory_space<vmem>>, vector<10x16x4xf32>
    tpu.vector_store %arg10[%c0_7, %c8, %c0_8], %13 {strides = array<i32>} : memref<10x26x4xf32, #tpu.memory_space<vmem>>, vector<10x16x4xf32>,
    %cst_9 = arith.constant 0.000000e+00 : f32
    %15 = vector.broadcast %cst_9 : f32 to vector<10x1x4xf32>
    %c0_10 = arith.constant 0 : index
    %c7 = arith.constant 7 : index
    %c0_11 = arith.constant 0 : index
    %16 = vector.load %arg10[%c0_10, %c7, %c0_11] : memref<10x26x4xf32, #tpu.memory_space<vmem>>, vector<10x1x4xf32>
    tpu.vector_store %arg10[%c0_10, %c7, %c0_11], %15 {strides = array<i32>} : memref<10x26x4xf32, #tpu.memory_space<vmem>>, vector<10x1x4xf32>,
    %cst_12 = arith.constant 0.000000e+00 : f32
    %17 = vector.broadcast %cst_12 : f32 to vector<10x2x4xf32>
    %c0_13 = arith.constant 0 : index
    %c24 = arith.constant 24 : index
    %c0_14 = arith.constant 0 : index
    %18 = vector.load %arg10[%c0_13, %c24, %c0_14] : memref<10x26x4xf32, #tpu.memory_space<vmem>>, vector<10x2x4xf32>
    tpu.vector_store %arg10[%c0_13, %c24, %c0_14], %17 {strides = array<i32>} : memref<10x26x4xf32, #tpu.memory_space<vmem>>, vector<10x2x4xf32>,
    %c0_i32 = arith.constant 0 : i32
    %19 = arith.cmpi eq, %arg1, %c0_i32 : i32
    %20 = arith.extui %19 : i1 to i32
    %c0_i32_15 = arith.constant 0 : i32
    %21 = arith.cmpi ne, %20, %c0_i32_15 : i32
    scf.if %21 {
      %cst_40 = arith.constant 0.000000e+00 : f32
      %64 = vector.broadcast %cst_40 : f32 to vector<1x19x4xf32>
      %c0_41 = arith.constant 0 : index
      %c7_42 = arith.constant 7 : index
      %c0_43 = arith.constant 0 : index
      %65 = vector.load %arg10[%c0_41, %c7_42, %c0_43] : memref<10x26x4xf32, #tpu.memory_space<vmem>>, vector<1x19x4xf32>
      tpu.vector_store %arg10[%c0_41, %c7_42, %c0_43], %64 {strides = array<i32>} : memref<10x26x4xf32, #tpu.memory_space<vmem>>, vector<1x19x4xf32>,
    } else {
    }
    %c1_i32 = arith.constant 1 : i32
    %22 = arith.cmpi eq, %arg1, %c1_i32 : i32
    %23 = arith.extui %22 : i1 to i32
    %c0_i32_16 = arith.constant 0 : i32
    %24 = arith.cmpi ne, %23, %c0_i32_16 : i32
    scf.if %24 {
      %cst_40 = arith.constant 0.000000e+00 : f32
      %64 = vector.broadcast %cst_40 : f32 to vector<1x19x4xf32>
      %c9 = arith.constant 9 : index
      %c7_41 = arith.constant 7 : index
      %c0_42 = arith.constant 0 : index
      %65 = vector.load %arg10[%c9, %c7_41, %c0_42] : memref<10x26x4xf32, #tpu.memory_space<vmem>>, vector<1x19x4xf32>
      tpu.vector_store %arg10[%c9, %c7_41, %c0_42], %64 {strides = array<i32>} : memref<10x26x4xf32, #tpu.memory_space<vmem>>, vector<1x19x4xf32>,
    } else {
    }
    %c0_17 = arith.constant 0 : index
    %c0_18 = arith.constant 0 : index
    %c0_19 = arith.constant 0 : index
    %25 = vector.load %arg10[%c0_17, %c0_18, %c0_19] : memref<10x26x4xf32, #tpu.memory_space<vmem>>, vector<10x26x4xf32>
    %26 = vector.extract_strided_slice %25 {offsets = [0, 0, 0], sizes = [8, 26, 4], strides = [1, 1, 1]} : vector<10x26x4xf32> to vector<8x26x4xf32>
    %27 = vector.extract_strided_slice %26 {offsets = [0, 7, 0], sizes = [8, 16, 4], strides = [1, 1, 1]} : vector<8x26x4xf32> to vector<8x16x4xf32>
    %28 = vector.extract_strided_slice %26 {offsets = [0, 8, 0], sizes = [8, 16, 4], strides = [1, 1, 1]} : vector<8x26x4xf32> to vector<8x16x4xf32>
    %29 = vector.extract_strided_slice %26 {offsets = [0, 9, 0], sizes = [8, 16, 4], strides = [1, 1, 1]} : vector<8x26x4xf32> to vector<8x16x4xf32>
    %30 = vector.extract_strided_slice %25 {offsets = [1, 0, 0], sizes = [8, 26, 4], strides = [1, 1, 1]} : vector<10x26x4xf32> to vector<8x26x4xf32>
    %31 = vector.extract_strided_slice %30 {offsets = [0, 7, 0], sizes = [8, 16, 4], strides = [1, 1, 1]} : vector<8x26x4xf32> to vector<8x16x4xf32>
    %32 = vector.extract_strided_slice %30 {offsets = [0, 8, 0], sizes = [8, 16, 4], strides = [1, 1, 1]} : vector<8x26x4xf32> to vector<8x16x4xf32>
    %33 = vector.extract_strided_slice %30 {offsets = [0, 9, 0], sizes = [8, 16, 4], strides = [1, 1, 1]} : vector<8x26x4xf32> to vector<8x16x4xf32>
    %34 = vector.extract_strided_slice %25 {offsets = [2, 0, 0], sizes = [8, 26, 4], strides = [1, 1, 1]} : vector<10x26x4xf32> to vector<8x26x4xf32>
    %35 = vector.extract_strided_slice %34 {offsets = [0, 7, 0], sizes = [8, 16, 4], strides = [1, 1, 1]} : vector<8x26x4xf32> to vector<8x16x4xf32>
    %36 = vector.extract_strided_slice %34 {offsets = [0, 8, 0], sizes = [8, 16, 4], strides = [1, 1, 1]} : vector<8x26x4xf32> to vector<8x16x4xf32>
    %37 = vector.extract_strided_slice %34 {offsets = [0, 9, 0], sizes = [8, 16, 4], strides = [1, 1, 1]} : vector<8x26x4xf32> to vector<8x16x4xf32>
    %38 = tpu.concatenate %27, %28, %29, %31, %32, %33, %35, %36, %37 in 2 : vector<8x16x4xf32>, vector<8x16x4xf32>, vector<8x16x4xf32>, vector<8x16x4xf32>, vector<8x16x4xf32>, vector<8x16x4xf32>, vector<8x16x4xf32>, vector<8x16x4xf32>, vector<8x16x4xf32> -> vector<8x16x36xf32>
    %39 = vector.shape_cast %38 : vector<8x16x36xf32> to vector<128x36xf32>
    %c0_20 = arith.constant 0 : index
    %c0_21 = arith.constant 0 : index
    %40 = vector.load %arg5[%c0_20, %c0_21] : memref<36x4xf32, #tpu.memory_space<vmem>>, vector<36x4xf32>
    %cst_22 = arith.constant dense<0.000000e+00> : vector<128x4xf32>
    %41 = tpu.matmul %39, %40, %cst_22 {dimension_numbers = #tpu.dot_dimension_numbers<[1], [0], [0], [1], [0, 0, 1, 1], [], []>} : vector<128x36xf32>, vector<36x4xf32>, vector<128x4xf32> -> vector<128x4xf32>
    %c0_23 = arith.constant 0 : index
    %c0_24 = arith.constant 0 : index
    %42 = vector.load %arg6[%c0_23, %c0_24] : memref<1x4xf32, #tpu.memory_space<vmem>>, vector<1x4xf32>
    %43 = vector.broadcast %42 : vector<1x4xf32> to vector<128x4xf32>
    %44 = arith.addf %41, %43 : vector<128x4xf32>
    %cst_25 = arith.constant 0.000000e+00 : f32
    %45 = vector.broadcast %cst_25 : f32 to vector<128x4xf32>
    %46 = arith.maximumf %44, %45 : vector<128x4xf32>
    %c1_i32_26 = arith.constant 1 : i32
    %47 = arith.addi %1, %c1_i32_26 : i32
    %c0_27 = arith.constant 0 : index
    %48 = arith.index_cast %47 : i32 to index
    %c0_28 = arith.constant 0 : index
    %c0_29 = arith.constant 0 : index
    %49 = vector.load %arg2[%c0_27, %48, %c0_28, %c0_29] : memref<1x18x16x4xf32, #tpu.memory_space<vmem>>, vector<1x8x16x4xf32>
    %50 = vector.shape_cast %49 : vector<1x8x16x4xf32> to vector<8x16x4xf32>
    %51 = vector.shape_cast %50 : vector<8x16x4xf32> to vector<128x4xf32>
    %52 = tpu.concatenate %46, %51 in 1 : vector<128x4xf32>, vector<128x4xf32> -> vector<128x8xf32>
    %c0_30 = arith.constant 0 : index
    %c0_31 = arith.constant 0 : index
    %53 = vector.load %arg7[%c0_30, %c0_31] : memref<8x8xf32, #tpu.memory_space<vmem>>, vector<8x8xf32>
    %cst_32 = arith.constant dense<0.000000e+00> : vector<128x8xf32>
    %54 = tpu.matmul %52, %53, %cst_32 {dimension_numbers = #tpu.dot_dimension_numbers<[1], [0], [0], [1], [0, 0, 1, 1], [], []>} : vector<128x8xf32>, vector<8x8xf32>, vector<128x8xf32> -> vector<128x8xf32>
    %c0_33 = arith.constant 0 : index
    %c0_34 = arith.constant 0 : index
    %55 = vector.load %arg8[%c0_33, %c0_34] : memref<1x8xf32, #tpu.memory_space<vmem>>, vector<1x8xf32>
    %56 = vector.broadcast %55 : vector<1x8xf32> to vector<128x8xf32>
    %57 = arith.addf %54, %56 : vector<128x8xf32>
    %cst_35 = arith.constant 0.000000e+00 : f32
    %58 = vector.broadcast %cst_35 : f32 to vector<128x8xf32>
    %59 = arith.maximumf %57, %58 : vector<128x8xf32>
    %60 = vector.shape_cast %59 : vector<128x8xf32> to vector<8x16x8xf32>
    %c0_36 = arith.constant 0 : index
    %c0_37 = arith.constant 0 : index
    %c0_38 = arith.constant 0 : index
    %c0_39 = arith.constant 0 : index
    %61 = vector.load %arg9[%c0_36, %c0_37, %c0_38, %c0_39] : memref<1x8x16x8xf32, #tpu.memory_space<vmem>>, vector<1x8x16x8xf32>
    %62 = vector.shape_cast %61 : vector<1x8x16x8xf32> to vector<8x16x8xf32>
    %63 = vector.shape_cast %60 : vector<8x16x8xf32> to vector<1x8x16x8xf32>
    tpu.vector_store %arg9[%c0_36, %c0_37, %c0_38, %c0_39], %63 {strides = array<i32>} : memref<1x8x16x8xf32, #tpu.memory_space<vmem>>, vector<1x8x16x8xf32>,
    return
  }
  func.func @transform_0(%arg0: i32, %arg1: i32) -> (i32, i32, i32, i32) {
    %c0_i32 = arith.constant 0 : i32
    %c0_i32_0 = arith.constant 0 : i32
    %c0_i32_1 = arith.constant 0 : i32
    %c0_i32_2 = arith.constant 0 : i32
    return %arg0, %c0_i32, %c0_i32_0, %c0_i32_1 : i32, i32, i32, i32
  }
  func.func @transform_1(%arg0: i32, %arg1: i32) -> (i32, i32) {
    %c0_i32 = arith.constant 0 : i32
    %c0_i32_0 = arith.constant 0 : i32
    %c0_i32_1 = arith.constant 0 : i32
    return %c0_i32, %c0_i32_0 : i32, i32
  }
  func.func @transform_2(%arg0: i32, %arg1: i32) -> (i32, i32) {
    %c0_i32 = arith.constant 0 : i32
    %c0_i32_0 = arith.constant 0 : i32
    %c0_i32_1 = arith.constant 0 : i32
    return %c0_i32, %c0_i32_0 : i32, i32
  }
  func.func @transform_3(%arg0: i32, %arg1: i32) -> (i32, i32) {
    %c0_i32 = arith.constant 0 : i32
    %c0_i32_0 = arith.constant 0 : i32
    %c0_i32_1 = arith.constant 0 : i32
    return %c0_i32, %c0_i32_0 : i32, i32
  }
  func.func @transform_4(%arg0: i32, %arg1: i32) -> (i32, i32) {
    %c0_i32 = arith.constant 0 : i32
    %c0_i32_0 = arith.constant 0 : i32
    %c0_i32_1 = arith.constant 0 : i32
    return %c0_i32, %c0_i32_0 : i32, i32
  }
  func.func @transform_5(%arg0: i32, %arg1: i32) -> (i32, i32) {
    %c0_i32 = arith.constant 0 : i32
    %c0_i32_0 = arith.constant 0 : i32
    %c0_i32_1 = arith.constant 0 : i32
    return %c0_i32, %c0_i32_0 : i32, i32
  }
  func.func @transform_6(%arg0: i32, %arg1: i32) -> (i32, i32) {
    %c0_i32 = arith.constant 0 : i32
    %c0_i32_0 = arith.constant 0 : i32
    %c0_i32_1 = arith.constant 0 : i32
    return %c0_i32, %c0_i32_0 : i32, i32
  }
  func.func @transform_7(%arg0: i32, %arg1: i32) -> (i32, i32, i32, i32) {
    %c0_i32 = arith.constant 0 : i32
    %c0_i32_0 = arith.constant 0 : i32
    %c0_i32_1 = arith.constant 0 : i32
    return %arg0, %arg1, %c0_i32, %c0_i32_0 : i32, i32, i32, i32
  }
}

</mosaic_0001>

<llo_original>
// kernel: tpu_custom_call.1
$region0: #{tpu_custom_call.1}
  #allocation0 [shape = 'u32[]', space=smem, size = 0x4, offset = 0x4, fixed_abs, tag = 'smem constant byte address 0x4 - core index']
  #allocation1 [shape = 'u32[144,128]{1,0:T(1,128)}', space=vmem, size = 0x12000, scoped, tag = 'internal scratch']
  #allocation2 [shape = 'f32[10,26,4]{2,1,0:T(8,128)}', space=vmem, size = 0x28000, scoped, tag = 'scratch operand']
  %s0 = inlined_call_operand.hbm [shape: f32[2,18,16,4], index: 0, kind: input, shape index: {}]
  %s1 = inlined_call_operand.hbm [shape: f32[4,4], index: 1, kind: input, shape index: {}]
  %s2 = inlined_call_operand.hbm [shape: f32[1,4], index: 2, kind: input, shape index: {}]
  %s3 = inlined_call_operand.hbm [shape: f32[36,4], index: 3, kind: input, shape index: {}]
  %s4 = inlined_call_operand.hbm [shape: f32[1,4], index: 4, kind: input, shape index: {}]
  %s5 = inlined_call_operand.hbm [shape: f32[8,8], index: 5, kind: input, shape index: {}]
  %s6 = inlined_call_operand.hbm [shape: f32[1,8], index: 6, kind: input, shape index: {}]
  %s7 = inlined_call_operand.hbm [shape: f32[2,16,16,8], index: 7, kind: output, shape index: {}]
  %s8 = sld [smem:[#allocation0]]
  $region97: #{tpu_custom_call.1} parent=0
    _
  %s10 = ssub.s32 1, %s8
  %s11 = scalar_select 0, %s10, %s8
  $region1: #{tpu_custom_call.1} parent=0
    #allocation3 [shape = 'u8[294912]{0}', space=vmem, size = 0x48000, scoped, tag = 'input window, operand 0']
    #allocation4 [shape = 's32[2]{0}', space=sflag, size = 0x8, scoped, tag = 'scoped memory for tpu_custom_call.1']
    #allocation5 [shape = 's32[2]{0}', space=sflag, size = 0x8, scoped, tag = 'scoped memory for tpu_custom_call.1']
    #allocation6 [shape = 'u8[2048]{0}', space=vmem, size = 0x800, scoped, tag = 'input window, operand 1, single buffered']
    #allocation7 [shape = 's32[1]{0}', space=sflag, size = 0x4, scoped, tag = 'scoped memory for tpu_custom_call.1']
    #allocation8 [shape = 'u8[512]{0}', space=vmem, size = 0x400, scoped, tag = 'input window, operand 2, single buffered']
    #allocation9 [shape = 'u8[20480]{0}', space=vmem, size = 0x5000, scoped, tag = 'input window, operand 3, single buffered']
    #allocation10 [shape = 's32[1]{0}', space=sflag, size = 0x4, scoped, tag = 'scoped memory for tpu_custom_call.1']
    #allocation11 [shape = 'u8[512]{0}', space=vmem, size = 0x400, scoped, tag = 'input window, operand 4, single buffered']
    #allocation12 [shape = 'u8[4096]{0}', space=vmem, size = 0x1000, scoped, tag = 'input window, operand 5, single buffered']
    #allocation13 [shape = 's32[1]{0}', space=sflag, size = 0x4, scoped, tag = 'scoped memory for tpu_custom_call.1']
    #allocation14 [shape = 'u8[512]{0}', space=vmem, size = 0x400, scoped, tag = 'input window, operand 6, single buffered']
    #allocation15 [shape = 'u8[131072]{0}', space=vmem, size = 0x20000, scoped, tag = 'output window, operand 0']
    %12 = vsyncpa [#allocation4], 0
    %s13 = scalar_lea.sflag [#allocation4], 1
    %14 = vsyncpa %s13, 0
    %15 = vsyncpa [#allocation7], 0
    %16 = vsyncpa [#allocation10], 0
    %17 = vsyncpa [#allocation13], 0
    %18 = vsyncpa [#allocation5], 0
    %s19 = scalar_lea.sflag [#allocation5], 1
    %20 = vsyncpa %s19, 0
    loop: start=0, step=1, limit=6
    $region2: #{tpu_custom_call.1} parent=1 // loop_pre_header
      _
    $region3: #{tpu_custom_call.1} parent=1 // loop_header
      %s22 = sphi 0, %s26
      %p23 = scmp.ge.s32.totalorder %s22, 6
      %s29 = sphi 0, %s41
      %s30 = sphi 0, %s37
      %s31 = sphi 0, %s29
      %s32 = sphi 0, %s30
      %s33 = sphi 0, %s31
      %s34 = sphi 0, %s32
      %s44 = sphi 0, %s46
      %s47 = sphi 0, %s44
      %s48 = sphi 0, %s47
      %s64 = sphi 0, %s48
      %s68 = sphi 0, %s68
      %s70 = sphi 0, %s68
      %s71 = sphi 0, %s70
      %s85 = sphi 0, %s71
      %s89 = sphi 0, %s89
      %s91 = sphi 0, %s89
      %s92 = sphi 0, %s91
      %s106 = sphi 0, %s92
      %s110 = sphi 0, %s110
      %s112 = sphi 0, %s110
      %s113 = sphi 0, %s112
      %s127 = sphi 0, %s113
      %s131 = sphi 0, %s131
      %s133 = sphi 0, %s131
      %s134 = sphi 0, %s133
      %s148 = sphi 0, %s134
      %s152 = sphi 0, %s152
      %s154 = sphi 0, %s152
      %s155 = sphi 0, %s154
      %s169 = sphi 0, %s155
      %s173 = sphi 0, %s173
      %s175 = sphi 0, %s173
      %s176 = sphi 0, %s175
      %s190 = sphi 0, %s176
      %s198 = sphi 0, %s200
      %s201 = sphi 0, %s198
      %s202 = sphi 0, %s201
      %s218 = sphi 0, %s202
    $region4: #{tpu_custom_call.1} parent=1 // loop_header_branch
      %25 = sbr.rel (%p23) target = $region8
    $region5: #{tpu_custom_call.1} parent=1 // loop_body
      %s27 = ssub.s32 %s22, 1
      %s28 = ssub.s32 %s22, 2
      %s35 = sadd.s32 1, %s30
      %p36 = scmp.ge.s32.totalorder %s35, 2
      %s37 = scalar_select %p36, 0, %s35
      %s38 = sadd.s32 1, %s29
      %s39 = scalar_select %p36, %s38, %s29
      %p40 = scmp.ge.s32.totalorder %s39, 2
      %s41 = scalar_select %p40, 0, %s39
      %s42 = ssub.s32 %s29, %s41
      %p43 = scmp.eq.s32.totalorder %s42, 0
      %s45 = sadd.s32 %s44, 1
      %s46 = scalar_select %p43, %s44, %s45
      %p49 = pneg %p43
      %p50 = scmp.eq.s32.totalorder %s22, 3
      %p51 = por %p49, %p50
      %p52 = scmp.ne.s32.totalorder %s44, %s47
      %p53 = scmp.eq.s32.totalorder %s22, 0
      %p54 = por %p52, %p53
      %p55 = scmp.ne.s32.totalorder %s44, %s47
      %p56 = scmp.eq.s32.totalorder %s27, 3
      %p57 = por %p55, %p56
      %p58 = scmp.ne.s32.totalorder %s47, %s48
      %p59 = scmp.eq.s32.totalorder %s27, 0
      %p60 = por %p58, %p59
      %p61 = scmp.ne.s32.totalorder %s47, %s48
      %p62 = scmp.eq.s32.totalorder %s28, 3
      %p63 = por %p61, %p62
      %p65 = scmp.ne.s32.totalorder %s48, %s64
      %p66 = scmp.eq.s32.totalorder %s28, 0
      %p67 = por %p65, %p66
      %s69 = sadd.s32 %s68, 1
      %p72 = scmp.eq.s32.totalorder %s22, 3
      %p73 = scmp.ne.s32.totalorder %s68, %s70
      %p74 = scmp.eq.s32.totalorder %s22, 0
      %p75 = por %p73, %p74
      %p76 = scmp.ne.s32.totalorder %s68, %s70
      %p77 = scmp.eq.s32.totalorder %s27, 3
      %p78 = por %p76, %p77
      %p79 = scmp.ne.s32.totalorder %s70, %s71
      %p80 = scmp.eq.s32.totalorder %s27, 0
      %p81 = por %p79, %p80
      %p82 = scmp.ne.s32.totalorder %s70, %s71
      %p83 = scmp.eq.s32.totalorder %s28, 3
      %p84 = por %p82, %p83
      %p86 = scmp.ne.s32.totalorder %s71, %s85
      %p87 = scmp.eq.s32.totalorder %s28, 0
      %p88 = por %p86, %p87
      %s90 = sadd.s32 %s89, 1
      %p93 = scmp.eq.s32.totalorder %s22, 3
      %p94 = scmp.ne.s32.totalorder %s89, %s91
      %p95 = scmp.eq.s32.totalorder %s22, 0
      %p96 = por %p94, %p95
      %p97 = scmp.ne.s32.totalorder %s89, %s91
      %p98 = scmp.eq.s32.totalorder %s27, 3
      %p99 = por %p97, %p98
      %p100 = scmp.ne.s32.totalorder %s91, %s92
      %p101 = scmp.eq.s32.totalorder %s27, 0
      %p102 = por %p100, %p101
      %p103 = scmp.ne.s32.totalorder %s91, %s92
      %p104 = scmp.eq.s32.totalorder %s28, 3
      %p105 = por %p103, %p104
      %p107 = scmp.ne.s32.totalorder %s92, %s106
      %p108 = scmp.eq.s32.totalorder %s28, 0
      %p109 = por %p107, %p108
      %s111 = sadd.s32 %s110, 1
      %p114 = scmp.eq.s32.totalorder %s22, 3
      %p115 = scmp.ne.s32.totalorder %s110, %s112
      %p116 = scmp.eq.s32.totalorder %s22, 0
      %p117 = por %p115, %p116
      %p118 = scmp.ne.s32.totalorder %s110, %s112
      %p119 = scmp.eq.s32.totalorder %s27, 3
      %p120 = por %p118, %p119
      %p121 = scmp.ne.s32.totalorder %s112, %s113
      %p122 = scmp.eq.s32.totalorder %s27, 0
      %p123 = por %p121, %p122
      %p124 = scmp.ne.s32.totalorder %s112, %s113
      %p125 = scmp.eq.s32.totalorder %s28, 3
      %p126 = por %p124, %p125
      %p128 = scmp.ne.s32.totalorder %s113, %s127
      %p129 = scmp.eq.s32.totalorder %s28, 0
      %p130 = por %p128, %p129
      %s132 = sadd.s32 %s131, 1
      %p135 = scmp.eq.s32.totalorder %s22, 3
      %p136 = scmp.ne.s32.totalorder %s131, %s133
      %p137 = scmp.eq.s32.totalorder %s22, 0
      %p138 = por %p136, %p137
      %p139 = scmp.ne.s32.totalorder %s131, %s133
      %p140 = scmp.eq.s32.totalorder %s27, 3
      %p141 = por %p139, %p140
      %p142 = scmp.ne.s32.totalorder %s133, %s134
      %p143 = scmp.eq.s32.totalorder %s27, 0
      %p144 = por %p142, %p143
      %p145 = scmp.ne.s32.totalorder %s133, %s134
      %p146 = scmp.eq.s32.totalorder %s28, 3
      %p147 = por %p145, %p146
      %p149 = scmp.ne.s32.totalorder %s134, %s148
      %p150 = scmp.eq.s32.totalorder %s28, 0
      %p151 = por %p149, %p150
      %s153 = sadd.s32 %s152, 1
      %p156 = scmp.eq.s32.totalorder %s22, 3
      %p157 = scmp.ne.s32.totalorder %s152, %s154
      %p158 = scmp.eq.s32.totalorder %s22, 0
      %p159 = por %p157, %p158
      %p160 = scmp.ne.s32.totalorder %s152, %s154
      %p161 = scmp.eq.s32.totalorder %s27, 3
      %p162 = por %p160, %p161
      %p163 = scmp.ne.s32.totalorder %s154, %s155
      %p164 = scmp.eq.s32.totalorder %s27, 0
      %p165 = por %p163, %p164
      %p166 = scmp.ne.s32.totalorder %s154, %s155
      %p167 = scmp.eq.s32.totalorder %s28, 3
      %p168 = por %p166, %p167
      %p170 = scmp.ne.s32.totalorder %s155, %s169
      %p171 = scmp.eq.s32.totalorder %s28, 0
      %p172 = por %p170, %p171
      %s174 = sadd.s32 %s173, 1
      %p177 = scmp.eq.s32.totalorder %s22, 3
      %p178 = scmp.ne.s32.totalorder %s173, %s175
      %p179 = scmp.eq.s32.totalorder %s22, 0
      %p180 = por %p178, %p179
      %p181 = scmp.ne.s32.totalorder %s173, %s175
      %p182 = scmp.eq.s32.totalorder %s27, 3
      %p183 = por %p181, %p182
      %p184 = scmp.ne.s32.totalorder %s175, %s176
      %p185 = scmp.eq.s32.totalorder %s27, 0
      %p186 = por %p184, %p185
      %p187 = scmp.ne.s32.totalorder %s175, %s176
      %p188 = scmp.eq.s32.totalorder %s28, 3
      %p189 = por %p187, %p188
      %p191 = scmp.ne.s32.totalorder %s176, %s190
      %p192 = scmp.eq.s32.totalorder %s28, 0
      %p193 = por %p191, %p192
      %s194 = ssub.s32 %s29, %s41
      %s195 = ssub.s32 %s30, %s37
      %s196 = sor.u32 %s194, %s195
      %p197 = scmp.eq.s32.totalorder %s196, 0
      %s199 = sadd.s32 %s198, 1
      %s200 = scalar_select %p197, %s198, %s199
      %p203 = pneg %p197
      %p204 = scmp.eq.s32.totalorder %s22, 3
      %p205 = por %p203, %p204
      %p206 = scmp.ne.s32.totalorder %s198, %s201
      %p207 = scmp.eq.s32.totalorder %s22, 0
      %p208 = por %p206, %p207
      %p209 = scmp.ne.s32.totalorder %s198, %s201
      %p210 = scmp.eq.s32.totalorder %s27, 3
      %p211 = por %p209, %p210
      %p212 = scmp.ne.s32.totalorder %s201, %s202
      %p213 = scmp.eq.s32.totalorder %s27, 0
      %p214 = por %p212, %p213
      %p215 = scmp.ne.s32.totalorder %s201, %s202
      %p216 = scmp.eq.s32.totalorder %s28, 3
      %p217 = por %p215, %p216
      %p219 = scmp.ne.s32.totalorder %s202, %s218
      %p220 = scmp.eq.s32.totalorder %s28, 0
      %p221 = por %p219, %p220
      %p222 = scmp.le.s32.totalorder 1, %s22
      %p223 = scmp.lt.s32.totalorder %s22, 5
      %p224 = pnand %p222, %p223
      %p225 = pneg %p224
      // Predicated region
      $region9: #{tpu_custom_call.1} parent=5 // pred_check
        _
      $region10: #{tpu_custom_call.1} parent=5 // pred_check_branch
        %227 = sbr.rel (%p224) target = $region12
      $region11: #{tpu_custom_call.1} parent=5 // pred_region
        %s228 = ssub.s32 %s22, 1
        // Predicated region
        $region13: #{tpu_custom_call.1} parent=11 // pred_check
          %p229 = pneg %p81
        $region14: #{tpu_custom_call.1} parent=11 // pred_check_branch
          %231 = sbr.rel (%p229) target = $region16
        $region15: #{tpu_custom_call.1} parent=11 // pred_region
          %s233 = ssub.s32 64, 64
          %234 = vsyncadd [#allocation7], %s233
          %s236 = sshll.u32 [#allocation6], 4
          %s237 = int_to_ptr.vmem [resolvable:$true] %s236
          %239 = dma.hbm_to_vmem [thread:$0]  %s1, 64, %s237, [#allocation7]
        $region16: #{tpu_custom_call.1} parent=11 // pred_fallthru
          _
        // Predicated region
        $region17: #{tpu_custom_call.1} parent=11 // pred_check
          %p240 = pneg %p102
        $region18: #{tpu_custom_call.1} parent=11 // pred_check_branch
          %242 = sbr.rel (%p240) target = $region20
        $region19: #{tpu_custom_call.1} parent=11 // pred_region
          %s244 = ssub.s32 16, 16
          %245 = vsyncadd [#allocation7], %s244
          %s247 = sshll.u32 [#allocation8], 4
          %s248 = int_to_ptr.vmem [resolvable:$true] %s247
          %250 = dma.hbm_to_vmem [thread:$0]  %s2, 16, %s248, [#allocation7]
        $region20: #{tpu_custom_call.1} parent=11 // pred_fallthru
          _
        // Predicated region
        $region21: #{tpu_custom_call.1} parent=11 // pred_check
          %p251 = pneg %p123
        $region22: #{tpu_custom_call.1} parent=11 // pred_check_branch
          %253 = sbr.rel (%p251) target = $region24
        $region23: #{tpu_custom_call.1} parent=11 // pred_region
          %s255 = ssub.s32 640, 640
          %256 = vsyncadd [#allocation10], %s255
          %s257 = sshll.u32 [#allocation9], 4
          %s258 = int_to_ptr.vmem [resolvable:$true] %s257
          %263 = dma.hbm_to_vmem [thread:$0]  %s3, 640, %s258, [#allocation10], 128, 128, 8
        $region24: #{tpu_custom_call.1} parent=11 // pred_fallthru
          _
        // Predicated region
        $region25: #{tpu_custom_call.1} parent=11 // pred_check
          %p264 = pneg %p144
        $region26: #{tpu_custom_call.1} parent=11 // pred_check_branch
          %266 = sbr.rel (%p264) target = $region28
        $region27: #{tpu_custom_call.1} parent=11 // pred_region
          %s268 = ssub.s32 16, 16
          %269 = vsyncadd [#allocation10], %s268
          %s271 = sshll.u32 [#allocation11], 4
          %s272 = int_to_ptr.vmem [resolvable:$true] %s271
          %274 = dma.hbm_to_vmem [thread:$0]  %s4, 16, %s272, [#allocation10]
        $region28: #{tpu_custom_call.1} parent=11 // pred_fallthru
          _
        // Predicated region
        $region29: #{tpu_custom_call.1} parent=11 // pred_check
          %p275 = pneg %p165
        $region30: #{tpu_custom_call.1} parent=11 // pred_check_branch
          %277 = sbr.rel (%p275) target = $region32
        $region31: #{tpu_custom_call.1} parent=11 // pred_region
          %s279 = ssub.s32 128, 128
          %280 = vsyncadd [#allocation13], %s279
          %s282 = sshll.u32 [#allocation12], 4
          %s283 = int_to_ptr.vmem [resolvable:$true] %s282
          %285 = dma.hbm_to_vmem [thread:$0]  %s5, 128, %s283, [#allocation13]
        $region32: #{tpu_custom_call.1} parent=11 // pred_fallthru
          _
        // Predicated region
        $region33: #{tpu_custom_call.1} parent=11 // pred_check
          %p286 = pneg %p186
        $region34: #{tpu_custom_call.1} parent=11 // pred_check_branch
          %288 = sbr.rel (%p286) target = $region36
        $region35: #{tpu_custom_call.1} parent=11 // pred_region
          %s290 = ssub.s32 16, 16
          %291 = vsyncadd [#allocation13], %s290
          %s293 = sshll.u32 [#allocation14], 4
          %s294 = int_to_ptr.vmem [resolvable:$true] %s293
          %296 = dma.hbm_to_vmem [thread:$0]  %s6, 16, %s294, [#allocation13]
        $region36: #{tpu_custom_call.1} parent=11 // pred_fallthru
          _
      $region12: #{tpu_custom_call.1} parent=5 // pred_fallthru
        _
      %p297 = scmp.lt.s32.totalorder %s22, 4
      // Predicated region
      $region37: #{tpu_custom_call.1} parent=5 // pred_check
        %p298 = pneg %p297
      $region38: #{tpu_custom_call.1} parent=5 // pred_check_branch
        %300 = sbr.rel (%p298) target = $region40
      $region39: #{tpu_custom_call.1} parent=5 // pred_region
        // Predicated region
        $region41: #{tpu_custom_call.1} parent=39 // pred_check
          %p301 = pneg %p54
        $region42: #{tpu_custom_call.1} parent=39 // pred_check_branch
          %303 = sbr.rel (%p301) target = $region44
        $region43: #{tpu_custom_call.1} parent=39 // pred_region
          %s304 = sand.u32 %s44, 1
          %s305 = scalar_lea.sflag [#allocation4], %s304
          %s306 = sand.u32 %s44, 1
          %s307 = smul.addr %s306, 288
          %s308 = scalar_lea.vmem [#allocation3], %s307
          %s310 = ssub.s32 4608, 4608
          %311 = vsyncadd %s305, %s310
          %s312 = smul.addr %s29, 36
          %s313 = smul.addr %s312, 128
          %s314 = scalar_lea.hbm %s0, %s313
          %s315 = sshll.u32 %s308, 4
          %s316 = int_to_ptr.vmem [resolvable:$true] %s315
          %321 = dma.hbm_to_vmem [thread:$0]  %s314, 4608, %s316, %s305, 128, 128, 8
        $region44: #{tpu_custom_call.1} parent=39 // pred_fallthru
          _
      $region40: #{tpu_custom_call.1} parent=5 // pred_fallthru
        _
      %p322 = scmp.le.s32.totalorder 1, %s22
      %p323 = scmp.lt.s32.totalorder %s22, 5
      %p324 = pnand %p322, %p323
      %p325 = pneg %p324
      // Predicated region
      $region45: #{tpu_custom_call.1} parent=5 // pred_check
        _
      $region46: #{tpu_custom_call.1} parent=5 // pred_check_branch
        %327 = sbr.rel (%p324) target = $region48
      $region47: #{tpu_custom_call.1} parent=5 // pred_region
        %s328 = ssub.s32 %s22, 1
        %s329 = sand.u32 %s47, 1
        %s330 = scalar_lea.sflag [#allocation4], %s329
        %s331 = sand.u32 %s47, 1
        %s332 = smul.addr %s331, 288
        %s333 = scalar_lea.vmem [#allocation3], %s332
        // Predicated region
        $region49: #{tpu_custom_call.1} parent=47 // pred_check
          %p334 = pneg %p60
        $region50: #{tpu_custom_call.1} parent=47 // pred_check_branch
          %336 = sbr.rel (%p334) target = $region52
        $region51: #{tpu_custom_call.1} parent=47 // pred_region
          %337 = dma.done %s330, 4608
        $region52: #{tpu_custom_call.1} parent=47 // pred_fallthru
          _
        // Predicated region
        $region53: #{tpu_custom_call.1} parent=47 // pred_check
          %p338 = pneg %p81
        $region54: #{tpu_custom_call.1} parent=47 // pred_check_branch
          %340 = sbr.rel (%p338) target = $region56
        $region55: #{tpu_custom_call.1} parent=47 // pred_region
          %341 = dma.done [#allocation7], 64
        $region56: #{tpu_custom_call.1} parent=47 // pred_fallthru
          _
        // Predicated region
        $region57: #{tpu_custom_call.1} parent=47 // pred_check
          %p342 = pneg %p102
        $region58: #{tpu_custom_call.1} parent=47 // pred_check_branch
          %344 = sbr.rel (%p342) target = $region60
        $region59: #{tpu_custom_call.1} parent=47 // pred_region
          %345 = dma.done [#allocation7], 16
        $region60: #{tpu_custom_call.1} parent=47 // pred_fallthru
          _
        // Predicated region
        $region61: #{tpu_custom_call.1} parent=47 // pred_check
          %p346 = pneg %p123
        $region62: #{tpu_custom_call.1} parent=47 // pred_check_branch
          %348 = sbr.rel (%p346) target = $region64
        $region63: #{tpu_custom_call.1} parent=47 // pred_region
          %349 = dma.done [#allocation10], 640
        $region64: #{tpu_custom_call.1} parent=47 // pred_fallthru
          _
        // Predicated region
        $region65: #{tpu_custom_call.1} parent=47 // pred_check
          %p350 = pneg %p144
        $region66: #{tpu_custom_call.1} parent=47 // pred_check_branch
          %352 = sbr.rel (%p350) target = $region68
        $region67: #{tpu_custom_call.1} parent=47 // pred_region
          %353 = dma.done [#allocation10], 16
        $region68: #{tpu_custom_call.1} parent=47 // pred_fallthru
          _
        // Predicated region
        $region69: #{tpu_custom_call.1} parent=47 // pred_check
          %p354 = pneg %p165
        $region70: #{tpu_custom_call.1} parent=47 // pred_check_branch
          %356 = sbr.rel (%p354) target = $region72
        $region71: #{tpu_custom_call.1} parent=47 // pred_region
          %357 = dma.done [#allocation13], 128
        $region72: #{tpu_custom_call.1} parent=47 // pred_fallthru
          _
        // Predicated region
        $region73: #{tpu_custom_call.1} parent=47 // pred_check
          %p358 = pneg %p186
        $region74: #{tpu_custom_call.1} parent=47 // pred_check_branch
          %360 = sbr.rel (%p358) target = $region76
        $region75: #{tpu_custom_call.1} parent=47 // pred_region
          %361 = dma.done [#allocation13], 16
        $region76: #{tpu_custom_call.1} parent=47 // pred_fallthru
          _
        %s362 = sand.u32 %s47, 1
        %s363 = scalar_lea.sflag [#allocation4], %s362
        %s364 = sand.u32 %s47, 1
        %s365 = smul.addr %s364, 288
        %s366 = scalar_lea.vmem [#allocation3], %s365
        %p367 = pneg %p60
        %p368 = pneg %p57
        %p369 = pneg %p81
        %p370 = pneg %p78
        %p371 = pneg %p102
        %p372 = pneg %p99
        %p373 = pneg %p123
        %p374 = pneg %p120
        %p375 = pneg %p144
        %p376 = pneg %p141
        %p377 = pneg %p165
        %p378 = pneg %p162
        %p379 = pneg %p186
        %p380 = pneg %p183
        %p381 = pneg %p214
        %p382 = pneg %p211
        %s383 = sand.u32 %s201, 1
        %s384 = scalar_lea.sflag [#allocation5], %s383
        %s385 = sand.u32 %s201, 1
        %s386 = smul.addr %s385, 128
        %s387 = scalar_lea.vmem [#allocation15], %s386
        %s388 = smul.u32 8, %s32
        %s389 = smul.u32 %s32, 8
        %s390 = smul.u32 %s389, 16
        %s391 = scalar_lea.vmem %s333, %s390 [#allocation3]
        %v392 = vld [vmem:[%s391] sm:$0xff]
        %v393 = vld [vmem:[%s391 + $0x8] sm:$0xff]
        %v394 = vld [vmem:[%s391 + $0x10] sm:$0xff]
        %v395 = vld [vmem:[%s391 + $0x18] sm:$0xff]
        %v396 = vld [vmem:[%s391 + $0x20] sm:$0xff]
        %v397 = vld [vmem:[%s391 + $0x28] sm:$0xff]
        %v398 = vld [vmem:[%s391 + $0x30] sm:$0xff]
        %v399 = vld [vmem:[%s391 + $0x38] sm:$0xff]
        %v400 = vld [vmem:[%s391 + $0x40] sm:$0xff]
        %v401 = vld [vmem:[%s391 + $0x48] sm:$0xff]
        %v402 = vld [vmem:[%s391 + $0x50] sm:$0xff]
        %v403 = vld [vmem:[%s391 + $0x58] sm:$0xff]
        %v404 = vld [vmem:[%s391 + $0x60] sm:$0xff]
        %v405 = vld [vmem:[%s391 + $0x68] sm:$0xff]
        %v406 = vld [vmem:[%s391 + $0x70] sm:$0xff]
        %v407 = vld [vmem:[%s391 + $0x78] sm:$0xff]
        %v408 = vld [vmem:[%s391 + $0x80] sm:$0xff]
        %v409 = vld [vmem:[%s391 + $0x88] sm:$0xff]
        %v410 = vld [vmem:[%s391 + $0x90] sm:$0xff]
        %v411 = vld [vmem:[%s391 + $0x98] sm:$0xff]
        %v412 = vld [vmem:[#allocation6] sm:$0xf]
        %v413 = vld [vmem:[#allocation8] sm:$0x1]
        %v415 = vlaneseq
        %v416 = vshrl.u32 %v415, 7
        %v417 = vsub.s32 0, %v416
        %v418 = vrot.slane %v413, %v417
        %vm420 = vcmask 31744
        %v422 = vsel %vm420, %v392, 0
        %v425 = vsel %vm420, %v393, 0
        %v428 = vsel %vm420, %v394, 0
        %v431 = vsel %vm420, %v395, 0
        %v434 = vsel %vm420, %v396, 0
        %v437 = vsel %vm420, %v397, 0
        %v440 = vsel %vm420, %v398, 0
        %v443 = vsel %vm420, %v399, 0
        %v446 = vsel %vm420, %v400, 0
        %v449 = vsel %vm420, %v401, 0
        %v452 = vsel %vm420, %v402, 0
        %v455 = vsel %vm420, %v403, 0
        %v458 = vsel %vm420, %v404, 0
        %v461 = vsel %vm420, %v405, 0
        %v464 = vsel %vm420, %v406, 0
        %v467 = vsel %vm420, %v407, 0
        %v470 = vsel %vm420, %v408, 0
        %v473 = vsel %vm420, %v409, 0
        %v476 = vsel %vm420, %v410, 0
        %v479 = vsel %vm420, %v411, 0
        %vm481 = vcmask 1043456
        %v483 = vsel %vm481, %v412, 0
        %485 = vmatprep.subr.mxu0 0.0
        %486 = vmatpush1.msra.mxu0 %v483
        %487 = vmatprep.subr.mxu0 0.0
        %488 = vmatpush1.msra.mxu0 0.0
        %489 = vmatprep.subr.mxu0 0.0
        %490 = vmatpush1.msra.mxu0 0.0
        %491 = vmatprep.subr.mxu0 0.0
        %492 = vmatpush1.msra.mxu0 0.0
        %493 = vmatprep.subr.mxu0 0.0
        %494 = vmatpush1.msra.mxu0 0.0
        %495 = vmatprep.subr.mxu0 0.0
        %496 = vmatpush1.msra.mxu0 0.0
        %497 = vmatprep.subr.mxu0 0.0
        %498 = vmatpush1.msra.mxu0 0.0
        %499 = vmatprep.subr.mxu0 0.0
        %500 = vmatpush1.msra.mxu0 0.0
        %501 = vmatprep.subr.mxu0 0.0
        %502 = vmatpush1.msra.mxu0 0.0
        %503 = vmatprep.subr.mxu0 0.0
        %504 = vmatpush1.msra.mxu0 0.0
        %505 = vmatprep.subr.mxu0 0.0
        %506 = vmatpush1.msra.mxu0 0.0
        %507 = vmatprep.subr.mxu0 0.0
        %508 = vmatpush1.msra.mxu0 0.0
        %509 = vmatprep.subr.mxu0 0.0
        %510 = vmatpush1.msra.mxu0 0.0
        %511 = vmatprep.subr.mxu0 0.0
        %512 = vmatpush1.msra.mxu0 0.0
        %513 = vmatprep.subr.mxu0 0.0
        %514 = vmatpush1.msra.mxu0 0.0
        %515 = vmatprep.subr.mxu0 0.0
        %516 = vmatpush1.msra.mxu0 0.0
        %517 = vmatprep.subr.mxu0 0.0
        %518 = vmatpush1.msra.mxu0 0.0
        %519 = vmatprep.subr.mxu0 0.0
        %520 = vmatpush1.msra.mxu0 0.0
        %521 = vmatprep.subr.mxu0 0.0
        %522 = vmatpush1.msra.mxu0 0.0
        %523 = vmatprep.subr.mxu0 0.0
        %524 = vmatpush1.msra.mxu0 0.0
        %525 = vmatprep.subr.mxu0 0.0
        %526 = vmatpush1.msra.mxu0 0.0
        %527 = vmatprep.subr.mxu0 0.0
        %528 = vmatpush1.msra.mxu0 0.0
        %529 = vmatprep.subr.mxu0 0.0
        %530 = vmatpush1.msra.mxu0 0.0
        %531 = vmatprep.subr.mxu0 0.0
        %532 = vmatpush1.msra.mxu0 0.0
        %533 = vmatprep.subr.mxu0 0.0
        %534 = vmatpush1.msra.mxu0 0.0
        %535 = vmatprep.subr.mxu0 0.0
        %536 = vmatpush1.msra.mxu0 0.0
        %537 = vmatprep.subr.mxu0 0.0
        %538 = vmatpush1.msra.mxu0 0.0
        %539 = vmatprep.subr.mxu0 0.0
        %540 = vmatpush1.msra.mxu0 0.0
        %541 = vmatprep.subr.mxu0 0.0
        %542 = vmatpush1.msra.mxu0 0.0
        %543 = vmatprep.subr.mxu0 0.0
        %544 = vmatpush1.msra.mxu0 0.0
        %545 = vmatprep.subr.mxu0 0.0
        %546 = vmatpush1.msra.mxu0 0.0
        %547 = vmatprep.subr.mxu0 0.0
        %548 = vmatpush1.msra.mxu0 0.0
        %549 = vmatprep.mubr.f32.mxu0 0.0
        %550 = vmatmul.mubr.f32.gmra.mrb[0].mxu0 %v422
        %v551 = vpop.f32.mrb[0].mxu0
        %v552 = vadd.f32 %v418, %v551
        %v553 = vpop.f32.mrb[0].mxu0
        %554 = vmatprep.mubr.f32.mxu0 0.0
        %555 = vmatmul.mubr.f32.gmra.mrb[0].mxu0 %v425
        %v556 = vpop.f32.mrb[0].mxu0
        %v557 = vadd.f32 %v418, %v556
        %v558 = vpop.f32.mrb[0].mxu0
        %559 = vmatprep.mubr.f32.mxu0 0.0
        %560 = vmatmul.mubr.f32.gmra.mrb[0].mxu0 %v428
        %v561 = vpop.f32.mrb[0].mxu0
        %v562 = vadd.f32 %v418, %v561
        %v563 = vpop.f32.mrb[0].mxu0
        %564 = vmatprep.mubr.f32.mxu0 0.0
        %565 = vmatmul.mubr.f32.gmra.mrb[0].mxu0 %v431
        %v566 = vpop.f32.mrb[0].mxu0
        %v567 = vadd.f32 %v418, %v566
        %v568 = vpop.f32.mrb[0].mxu0
        %569 = vmatprep.mubr.f32.mxu0 0.0
        %570 = vmatmul.mubr.f32.gmra.mrb[0].mxu0 %v434
        %v571 = vpop.f32.mrb[0].mxu0
        %v572 = vadd.f32 %v418, %v571
        %v573 = vpop.f32.mrb[0].mxu0
        %574 = vmatprep.mubr.f32.mxu0 0.0
        %575 = vmatmul.mubr.f32.gmra.mrb[0].mxu0 %v437
        %v576 = vpop.f32.mrb[0].mxu0
        %v577 = vadd.f32 %v418, %v576
        %v578 = vpop.f32.mrb[0].mxu0
        %579 = vmatprep.mubr.f32.mxu0 0.0
        %580 = vmatmul.mubr.f32.gmra.mrb[0].mxu0 %v440
        %v581 = vpop.f32.mrb[0].mxu0
        %v582 = vadd.f32 %v418, %v581
        %v583 = vpop.f32.mrb[0].mxu0
        %584 = vmatprep.mubr.f32.mxu0 0.0
        %585 = vmatmul.mubr.f32.gmra.mrb[0].mxu0 %v443
        %v586 = vpop.f32.mrb[0].mxu0
        %v587 = vadd.f32 %v418, %v586
        %v588 = vpop.f32.mrb[0].mxu0
        %589 = vmatprep.mubr.f32.mxu0 0.0
        %590 = vmatmul.mubr.f32.gmra.mrb[0].mxu0 %v446
        %v591 = vpop.f32.mrb[0].mxu0
        %v592 = vadd.f32 %v418, %v591
        %v593 = vpop.f32.mrb[0].mxu0
        %594 = vmatprep.mubr.f32.mxu0 0.0
        %595 = vmatmul.mubr.f32.gmra.mrb[0].mxu0 %v449
        %v596 = vpop.f32.mrb[0].mxu0
        %v597 = vadd.f32 %v418, %v596
        %v598 = vpop.f32.mrb[0].mxu0
        %599 = vmatprep.mubr.f32.mxu0 0.0
        %600 = vmatmul.mubr.f32.gmra.mrb[0].mxu0 %v452
        %v601 = vpop.f32.mrb[0].mxu0
        %v602 = vadd.f32 %v418, %v601
        %v603 = vpop.f32.mrb[0].mxu0
        %604 = vmatprep.mubr.f32.mxu0 0.0
        %605 = vmatmul.mubr.f32.gmra.mrb[0].mxu0 %v455
        %v606 = vpop.f32.mrb[0].mxu0
        %v607 = vadd.f32 %v418, %v606
        %v608 = vpop.f32.mrb[0].mxu0
        %609 = vmatprep.mubr.f32.mxu0 0.0
        %610 = vmatmul.mubr.f32.gmra.mrb[0].mxu0 %v458
        %v611 = vpop.f32.mrb[0].mxu0
        %v612 = vadd.f32 %v418, %v611
        %v613 = vpop.f32.mrb[0].mxu0
        %614 = vmatprep.mubr.f32.mxu0 0.0
        %615 = vmatmul.mubr.f32.gmra.mrb[0].mxu0 %v461
        %v616 = vpop.f32.mrb[0].mxu0
        %v617 = vadd.f32 %v418, %v616
        %v618 = vpop.f32.mrb[0].mxu0
        %619 = vmatprep.mubr.f32.mxu0 0.0
        %620 = vmatmul.mubr.f32.gmra.mrb[0].mxu0 %v464
        %v621 = vpop.f32.mrb[0].mxu0
        %v622 = vadd.f32 %v418, %v621
        %v623 = vpop.f32.mrb[0].mxu0
        %624 = vmatprep.mubr.f32.mxu0 0.0
        %625 = vmatmul.mubr.f32.gmra.mrb[0].mxu0 %v467
        %v626 = vpop.f32.mrb[0].mxu0
        %v627 = vadd.f32 %v418, %v626
        %v628 = vpop.f32.mrb[0].mxu0
        %629 = vmatprep.mubr.f32.mxu0 0.0
        %630 = vmatmul.mubr.f32.gmra.mrb[0].mxu0 %v470
        %v631 = vpop.f32.mrb[0].mxu0
        %v632 = vadd.f32 %v418, %v631
        %v633 = vpop.f32.mrb[0].mxu0
        %634 = vmatprep.mubr.f32.mxu0 0.0
        %635 = vmatmul.mubr.f32.gmra.mrb[0].mxu0 %v473
        %v636 = vpop.f32.mrb[0].mxu0
        %v637 = vadd.f32 %v418, %v636
        %v638 = vpop.f32.mrb[0].mxu0
        %639 = vmatprep.mubr.f32.mxu0 0.0
        %640 = vmatmul.mubr.f32.gmra.mrb[0].mxu0 %v476
        %v641 = vpop.f32.mrb[0].mxu0
        %v642 = vadd.f32 %v418, %v641
        %v643 = vpop.f32.mrb[0].mxu0
        %644 = vmatprep.mubr.f32.mxu0 0.0
        %645 = vmatmul.mubr.f32.gmra.mrb[0].mxu0 %v479
        %v646 = vpop.f32.mrb[0].mxu0
        %v647 = vadd.f32 %v418, %v646
        %v648 = vpop.f32.mrb[0].mxu0
        %649 = vdwg.mxu0
        %v650 = vmax.f32 %v552, 0.0
        %v651 = vmax.f32 %v557, 0.0
        %v652 = vmax.f32 %v562, 0.0
        %v653 = vmax.f32 %v567, 0.0
        %v654 = vmax.f32 %v572, 0.0
        %v655 = vmax.f32 %v577, 0.0
        %v656 = vmax.f32 %v582, 0.0
        %v657 = vmax.f32 %v587, 0.0
        %v658 = vmax.f32 %v592, 0.0
        %v659 = vmax.f32 %v597, 0.0
        %v660 = vmax.f32 %v602, 0.0
        %v661 = vmax.f32 %v607, 0.0
        %v662 = vmax.f32 %v612, 0.0
        %v663 = vmax.f32 %v617, 0.0
        %v664 = vmax.f32 %v622, 0.0
        %v665 = vmax.f32 %v627, 0.0
        %v666 = vmax.f32 %v632, 0.0
        %v667 = vmax.f32 %v637, 0.0
        %v668 = vmax.f32 %v642, 0.0
        %v669 = vmax.f32 %v647, 0.0
        %670 = vst.msk [vmem:[#allocation2 + $0x8] sm:$0xff] %vm420, %v650
        %671 = vst.msk [vmem:[#allocation2 + $0x10] sm:$0xff] %vm420, %v651
        %672 = vst.msk [vmem:[#allocation2 + $0x28] sm:$0xff] %vm420, %v652
        %673 = vst.msk [vmem:[#allocation2 + $0x30] sm:$0xff] %vm420, %v653
        %674 = vst.msk [vmem:[#allocation2 + $0x48] sm:$0xff] %vm420, %v654
        %675 = vst.msk [vmem:[#allocation2 + $0x50] sm:$0xff] %vm420, %v655
        %676 = vst.msk [vmem:[#allocation2 + $0x68] sm:$0xff] %vm420, %v656
        %677 = vst.msk [vmem:[#allocation2 + $0x70] sm:$0xff] %vm420, %v657
        %678 = vst.msk [vmem:[#allocation2 + $0x88] sm:$0xff] %vm420, %v658
        %679 = vst.msk [vmem:[#allocation2 + $0x90] sm:$0xff] %vm420, %v659
        %680 = vst.msk [vmem:[#allocation2 + $0xa8] sm:$0xff] %vm420, %v660
        %681 = vst.msk [vmem:[#allocation2 + $0xb0] sm:$0xff] %vm420, %v661
        %682 = vst.msk [vmem:[#allocation2 + $0xc8] sm:$0xff] %vm420, %v662
        %683 = vst.msk [vmem:[#allocation2 + $0xd0] sm:$0xff] %vm420, %v663
        %684 = vst.msk [vmem:[#allocation2 + $0xe8] sm:$0xff] %vm420, %v664
        %685 = vst.msk [vmem:[#allocation2 + $0xf0] sm:$0xff] %vm420, %v665
        %686 = vst.msk [vmem:[#allocation2 + $0x108] sm:$0xff] %vm420, %v666
        %687 = vst.msk [vmem:[#allocation2 + $0x110] sm:$0xff] %vm420, %v667
        %688 = vst.msk [vmem:[#allocation2 + $0x128] sm:$0xff] %vm420, %v668
        %689 = vst.msk [vmem:[#allocation2 + $0x130] sm:$0xff] %vm420, %v669
        %vm690 = vcmask 24576
        %691 = vst.msk [vmem:[#allocation2 + $0x7] sm:$0x1] %vm690, 0.0
        %692 = vst.msk [vmem:[#allocation2 + $0x27] sm:$0x1] %vm690, 0.0
        %693 = vst.msk [vmem:[#allocation2 + $0x47] sm:$0x1] %vm690, 0.0
        %694 = vst.msk [vmem:[#allocation2 + $0x67] sm:$0x1] %vm690, 0.0
        %695 = vst.msk [vmem:[#allocation2 + $0x87] sm:$0x1] %vm690, 0.0
        %696 = vst.msk [vmem:[#allocation2 + $0xa7] sm:$0x1] %vm690, 0.0
        %697 = vst.msk [vmem:[#allocation2 + $0xc7] sm:$0x1] %vm690, 0.0
        %698 = vst.msk [vmem:[#allocation2 + $0xe7] sm:$0x1] %vm690, 0.0
        %699 = vst.msk [vmem:[#allocation2 + $0x107] sm:$0x1] %vm690, 0.0
        %700 = vst.msk [vmem:[#allocation2 + $0x127] sm:$0x1] %vm690, 0.0
        %vm701 = vcmask 25600
        %702 = vst.msk [vmem:[#allocation2 + $0x18] sm:$0x3] %vm701, 0.0
        %703 = vst.msk [vmem:[#allocation2 + $0x38] sm:$0x3] %vm701, 0.0
        %704 = vst.msk [vmem:[#allocation2 + $0x58] sm:$0x3] %vm701, 0.0
        %705 = vst.msk [vmem:[#allocation2 + $0x78] sm:$0x3] %vm701, 0.0
        %706 = vst.msk [vmem:[#allocation2 + $0x98] sm:$0x3] %vm701, 0.0
        %707 = vst.msk [vmem:[#allocation2 + $0xb8] sm:$0x3] %vm701, 0.0
        %708 = vst.msk [vmem:[#allocation2 + $0xd8] sm:$0x3] %vm701, 0.0
        %709 = vst.msk [vmem:[#allocation2 + $0xf8] sm:$0x3] %vm701, 0.0
        %710 = vst.msk [vmem:[#allocation2 + $0x118] sm:$0x3] %vm701, 0.0
        %711 = vst.msk [vmem:[#allocation2 + $0x138] sm:$0x3] %vm701, 0.0
        %p712 = scmp.eq.s32.totalorder %s32, 0
        // Predicated region
        $region77: #{tpu_custom_call.1} parent=47 // pred_check
          %p713 = pneg %p712
        $region78: #{tpu_custom_call.1} parent=47 // pred_check_branch
          %715 = sbr.rel (%p713) target = $region80
        $region79: #{tpu_custom_call.1} parent=47 // pred_region
          %716 = vst.msk [vmem:[#allocation2 + $0x7] sm:$0xff] %vm420, 0.0
          %717 = vst.msk [vmem:[#allocation2 + $0xf] sm:$0xff] %vm420, 0.0
          %vm718 = vcmask 26624
          %719 = vst.msk [vmem:[#allocation2 + $0x17] sm:$0x7] %vm718, 0.0
        $region80: #{tpu_custom_call.1} parent=47 // pred_fallthru
          _
        %p720 = scmp.eq.s32.totalorder %s32, 1
        // Predicated region
        $region81: #{tpu_custom_call.1} parent=47 // pred_check
          %p721 = pneg %p720
        $region82: #{tpu_custom_call.1} parent=47 // pred_check_branch
          %723 = sbr.rel (%p721) target = $region84
        $region83: #{tpu_custom_call.1} parent=47 // pred_region
          %s724 = scalar_lea.vmem [#allocation2], 288
          %725 = vst.msk [vmem:[%s724 + $0x7] sm:$0xff] %vm420, 0.0
          %726 = vst.msk [vmem:[%s724 + $0xf] sm:$0xff] %vm420, 0.0
          %vm727 = vcmask 26624
          %728 = vst.msk [vmem:[%s724 + $0x17] sm:$0x7] %vm727, 0.0
        $region84: #{tpu_custom_call.1} parent=47 // pred_fallthru
          _
        %v729 = vld [vmem:[#allocation2] sm:$0xff]
        %v730 = vld [vmem:[#allocation2 + $0x8] sm:$0xff]
        %v731 = vld [vmem:[#allocation2 + $0x10] sm:$0xff]
        %v732 = vld [vmem:[#allocation2 + $0x18] sm:$0x3]
        %v733 = vld [vmem:[#allocation2 + $0x20] sm:$0xff]
        %v734 = vld [vmem:[#allocation2 + $0x28] sm:$0xff]
        %v735 = vld [vmem:[#allocation2 + $0x30] sm:$0xff]
        %v736 = vld [vmem:[#allocation2 + $0x38] sm:$0x3]
        %v737 = vld [vmem:[#allocation2 + $0x40] sm:$0xff]
        %v738 = vld [vmem:[#allocation2 + $0x48] sm:$0xff]
        %v739 = vld [vmem:[#allocation2 + $0x50] sm:$0xff]
        %v740 = vld [vmem:[#allocation2 + $0x58] sm:$0x3]
        %v741 = vld [vmem:[#allocation2 + $0x60] sm:$0xff]
        %v742 = vld [vmem:[#allocation2 + $0x68] sm:$0xff]
        %v743 = vld [vmem:[#allocation2 + $0x70] sm:$0xff]
        %v744 = vld [vmem:[#allocation2 + $0x78] sm:$0x3]
        %v745 = vld [vmem:[#allocation2 + $0x80] sm:$0xff]
        %v746 = vld [vmem:[#allocation2 + $0x88] sm:$0xff]
        %v747 = vld [vmem:[#allocation2 + $0x90] sm:$0xff]
        %v748 = vld [vmem:[#allocation2 + $0x98] sm:$0x3]
        %v749 = vld [vmem:[#allocation2 + $0xa0] sm:$0xff]
        %v750 = vld [vmem:[#allocation2 + $0xa8] sm:$0xff]
        %v751 = vld [vmem:[#allocation2 + $0xb0] sm:$0xff]
        %v752 = vld [vmem:[#allocation2 + $0xb8] sm:$0x3]
        %v753 = vld [vmem:[#allocation2 + $0xc0] sm:$0xff]
        %v754 = vld [vmem:[#allocation2 + $0xc8] sm:$0xff]
        %v755 = vld [vmem:[#allocation2 + $0xd0] sm:$0xff]
        %v756 = vld [vmem:[#allocation2 + $0xd8] sm:$0x3]
        %v757 = vld [vmem:[#allocation2 + $0xe0] sm:$0xff]
        %v758 = vld [vmem:[#allocation2 + $0xe8] sm:$0xff]
        %v759 = vld [vmem:[#allocation2 + $0xf0] sm:$0xff]
        %v760 = vld [vmem:[#allocation2 + $0xf8] sm:$0x3]
        %v761 = vld [vmem:[#allocation2 + $0x100] sm:$0xff]
        %v762 = vld [vmem:[#allocation2 + $0x108] sm:$0xff]
        %v763 = vld [vmem:[#allocation2 + $0x110] sm:$0xff]
        %v764 = vld [vmem:[#allocation2 + $0x118] sm:$0x3]
        %v765 = vld [vmem:[#allocation2 + $0x120] sm:$0xff]
        %v766 = vld [vmem:[#allocation2 + $0x128] sm:$0xff]
        %v767 = vld [vmem:[#allocation2 + $0x130] sm:$0xff]
        %v768 = vld [vmem:[#allocation2 + $0x138] sm:$0x3]
        %vm785 = vcmask 1046528
        %v786 = vrot.slane %v730, 1
        %v787 = vrot.slane %v731, 1
        %v788 = vsel %vm785, %v786, %v787
        %v789 = vrot.slane %v734, 1
        %v790 = vrot.slane %v735, 1
        %v791 = vsel %vm785, %v789, %v790
        %v792 = vrot.slane %v738, 1
        %v793 = vrot.slane %v739, 1
        %v794 = vsel %vm785, %v792, %v793
        %v795 = vrot.slane %v742, 1
        %v796 = vrot.slane %v743, 1
        %v797 = vsel %vm785, %v795, %v796
        %v798 = vrot.slane %v746, 1
        %v799 = vrot.slane %v747, 1
        %v800 = vsel %vm785, %v798, %v799
        %v801 = vrot.slane %v750, 1
        %v802 = vrot.slane %v751, 1
        %v803 = vsel %vm785, %v801, %v802
        %v804 = vrot.slane %v754, 1
        %v805 = vrot.slane %v755, 1
        %v806 = vsel %vm785, %v804, %v805
        %v807 = vrot.slane %v758, 1
        %v808 = vrot.slane %v759, 1
        %v809 = vsel %vm785, %v807, %v808
        %810 = vrot.lane.b32.xlu0 %v786, 4
        %v811 = vpop.permute.xlu0 %810
        %812 = vrot.lane.b32.xlu0 %v788, 4
        %v813 = vpop.permute.xlu0 %812
        %814 = vrot.lane.b32.xlu0 %v787, 4
        %v815 = vpop.permute.xlu0 %814
        %816 = vrot.lane.b32.xlu0 %v789, 4
        %v817 = vpop.permute.xlu0 %816
        %818 = vrot.lane.b32.xlu0 %v791, 4
        %v819 = vpop.permute.xlu0 %818
        %820 = vrot.lane.b32.xlu0 %v790, 4
        %v821 = vpop.permute.xlu0 %820
        %822 = vrot.lane.b32.xlu0 %v792, 4
        %v823 = vpop.permute.xlu0 %822
        %824 = vrot.lane.b32.xlu0 %v794, 4
        %v825 = vpop.permute.xlu0 %824
        %826 = vrot.lane.b32.xlu0 %v793, 4
        %v827 = vpop.permute.xlu0 %826
        %828 = vrot.lane.b32.xlu0 %v795, 4
        %v829 = vpop.permute.xlu0 %828
        %830 = vrot.lane.b32.xlu0 %v797, 4
        %v831 = vpop.permute.xlu0 %830
        %832 = vrot.lane.b32.xlu0 %v796, 4
        %v833 = vpop.permute.xlu0 %832
        %834 = vrot.lane.b32.xlu0 %v798, 4
        %v835 = vpop.permute.xlu0 %834
        %836 = vrot.lane.b32.xlu0 %v800, 4
        %v837 = vpop.permute.xlu0 %836
        %838 = vrot.lane.b32.xlu0 %v799, 4
        %v839 = vpop.permute.xlu0 %838
        %840 = vrot.lane.b32.xlu0 %v801, 4
        %v841 = vpop.permute.xlu0 %840
        %842 = vrot.lane.b32.xlu0 %v803, 4
        %v843 = vpop.permute.xlu0 %842
        %844 = vrot.lane.b32.xlu0 %v802, 4
        %v845 = vpop.permute.xlu0 %844
        %846 = vrot.lane.b32.xlu0 %v804, 4
        %v847 = vpop.permute.xlu0 %846
        %848 = vrot.lane.b32.xlu0 %v806, 4
        %v849 = vpop.permute.xlu0 %848
        %850 = vrot.lane.b32.xlu0 %v805, 4
        %v851 = vpop.permute.xlu0 %850
        %852 = vrot.lane.b32.xlu0 %v807, 4
        %v853 = vpop.permute.xlu0 %852
        %854 = vrot.lane.b32.xlu0 %v809, 4
        %v855 = vpop.permute.xlu0 %854
        %856 = vrot.lane.b32.xlu0 %v808, 4
        %v857 = vpop.permute.xlu0 %856
        %vm890 = vcmask 1045504
        %v891 = vrot.slane %v730, 2
        %v892 = vrot.slane %v731, 2
        %v893 = vsel %vm890, %v891, %v892
        %v894 = vrot.slane %v732, 2
        %v895 = vsel %vm890, %v892, %v894
        %v896 = vrot.slane %v734, 2
        %v897 = vrot.slane %v735, 2
        %v898 = vsel %vm890, %v896, %v897
        %v899 = vrot.slane %v736, 2
        %v900 = vsel %vm890, %v897, %v899
        %v901 = vrot.slane %v738, 2
        %v902 = vrot.slane %v739, 2
        %v903 = vsel %vm890, %v901, %v902
        %v904 = vrot.slane %v740, 2
        %v905 = vsel %vm890, %v902, %v904
        %v906 = vrot.slane %v742, 2
        %v907 = vrot.slane %v743, 2
        %v908 = vsel %vm890, %v906, %v907
        %v909 = vrot.slane %v744, 2
        %v910 = vsel %vm890, %v907, %v909
        %v911 = vrot.slane %v746, 2
        %v912 = vrot.slane %v747, 2
        %v913 = vsel %vm890, %v911, %v912
        %v914 = vrot.slane %v748, 2
        %v915 = vsel %vm890, %v912, %v914
        %v916 = vrot.slane %v750, 2
        %v917 = vrot.slane %v751, 2
        %v918 = vsel %vm890, %v916, %v917
        %v919 = vrot.slane %v752, 2
        %v920 = vsel %vm890, %v917, %v919
        %v921 = vrot.slane %v754, 2
        %v922 = vrot.slane %v755, 2
        %v923 = vsel %vm890, %v921, %v922
        %v924 = vrot.slane %v756, 2
        %v925 = vsel %vm890, %v922, %v924
        %v926 = vrot.slane %v758, 2
        %v927 = vrot.slane %v759, 2
        %v928 = vsel %vm890, %v926, %v927
        %v929 = vrot.slane %v760, 2
        %v930 = vsel %vm890, %v927, %v929
        %931 = vrot.lane.b32.xlu0 %v891, 8
        %v932 = vpop.permute.xlu0 %931
        %933 = vrot.lane.b32.xlu0 %v893, 8
        %v934 = vpop.permute.xlu0 %933
        %935 = vrot.lane.b32.xlu0 %v895, 8
        %v936 = vpop.permute.xlu0 %935
        %937 = vrot.lane.b32.xlu0 %v896, 8
        %v938 = vpop.permute.xlu0 %937
        %939 = vrot.lane.b32.xlu0 %v898, 8
        %v940 = vpop.permute.xlu0 %939
        %941 = vrot.lane.b32.xlu0 %v900, 8
        %v942 = vpop.permute.xlu0 %941
        %943 = vrot.lane.b32.xlu0 %v901, 8
        %v944 = vpop.permute.xlu0 %943
        %945 = vrot.lane.b32.xlu0 %v903, 8
        %v946 = vpop.permute.xlu0 %945
        %947 = vrot.lane.b32.xlu0 %v905, 8
        %v948 = vpop.permute.xlu0 %947
        %949 = vrot.lane.b32.xlu0 %v906, 8
        %v950 = vpop.permute.xlu0 %949
        %951 = vrot.lane.b32.xlu0 %v908, 8
        %v952 = vpop.permute.xlu0 %951
        %953 = vrot.lane.b32.xlu0 %v910, 8
        %v954 = vpop.permute.xlu0 %953
        %955 = vrot.lane.b32.xlu0 %v911, 8
        %v956 = vpop.permute.xlu0 %955
        %957 = vrot.lane.b32.xlu0 %v913, 8
        %v958 = vpop.permute.xlu0 %957
        %959 = vrot.lane.b32.xlu0 %v915, 8
        %v960 = vpop.permute.xlu0 %959
        %961 = vrot.lane.b32.xlu0 %v916, 8
        %v962 = vpop.permute.xlu0 %961
        %963 = vrot.lane.b32.xlu0 %v918, 8
        %v964 = vpop.permute.xlu0 %963
        %965 = vrot.lane.b32.xlu0 %v920, 8
        %v966 = vpop.permute.xlu0 %965
        %967 = vrot.lane.b32.xlu0 %v921, 8
        %v968 = vpop.permute.xlu0 %967
        %969 = vrot.lane.b32.xlu0 %v923, 8
        %v970 = vpop.permute.xlu0 %969
        %971 = vrot.lane.b32.xlu0 %v925, 8
        %v972 = vpop.permute.xlu0 %971
        %973 = vrot.lane.b32.xlu0 %v926, 8
        %v974 = vpop.permute.xlu0 %973
        %975 = vrot.lane.b32.xlu0 %v928, 8
        %v976 = vpop.permute.xlu0 %975
        %977 = vrot.lane.b32.xlu0 %v930, 8
        %v978 = vpop.permute.xlu0 %977
        %1013 = vrot.lane.b32.xlu0 %v733, 12
        %v1014 = vpop.permute.xlu0 %1013
        %1015 = vrot.lane.b32.xlu0 %v734, 12
        %v1016 = vpop.permute.xlu0 %1015
        %1017 = vrot.lane.b32.xlu0 %v735, 12
        %v1018 = vpop.permute.xlu0 %1017
        %1019 = vrot.lane.b32.xlu0 %v737, 12
        %v1020 = vpop.permute.xlu0 %1019
        %1021 = vrot.lane.b32.xlu0 %v738, 12
        %v1022 = vpop.permute.xlu0 %1021
        %1023 = vrot.lane.b32.xlu0 %v739, 12
        %v1024 = vpop.permute.xlu0 %1023
        %1025 = vrot.lane.b32.xlu0 %v741, 12
        %v1026 = vpop.permute.xlu0 %1025
        %1027 = vrot.lane.b32.xlu0 %v742, 12
        %v1028 = vpop.permute.xlu0 %1027
        %1029 = vrot.lane.b32.xlu0 %v743, 12
        %v1030 = vpop.permute.xlu0 %1029
        %1031 = vrot.lane.b32.xlu0 %v745, 12
        %v1032 = vpop.permute.xlu0 %1031
        %1033 = vrot.lane.b32.xlu0 %v746, 12
        %v1034 = vpop.permute.xlu0 %1033
        %1035 = vrot.lane.b32.xlu0 %v747, 12
        %v1036 = vpop.permute.xlu0 %1035
        %1037 = vrot.lane.b32.xlu0 %v749, 12
        %v1038 = vpop.permute.xlu0 %1037
        %1039 = vrot.lane.b32.xlu0 %v750, 12
        %v1040 = vpop.permute.xlu0 %1039
        %1041 = vrot.lane.b32.xlu0 %v751, 12
        %v1042 = vpop.permute.xlu0 %1041
        %1043 = vrot.lane.b32.xlu0 %v753, 12
        %v1044 = vpop.permute.xlu0 %1043
        %1045 = vrot.lane.b32.xlu0 %v754, 12
        %v1046 = vpop.permute.xlu0 %1045
        %1047 = vrot.lane.b32.xlu0 %v755, 12
        %v1048 = vpop.permute.xlu0 %1047
        %1049 = vrot.lane.b32.xlu0 %v757, 12
        %v1050 = vpop.permute.xlu0 %1049
        %1051 = vrot.lane.b32.xlu0 %v758, 12
        %v1052 = vpop.permute.xlu0 %1051
        %1053 = vrot.lane.b32.xlu0 %v759, 12
        %v1054 = vpop.permute.xlu0 %1053
        %1055 = vrot.lane.b32.xlu0 %v761, 12
        %v1056 = vpop.permute.xlu0 %1055
        %1057 = vrot.lane.b32.xlu0 %v762, 12
        %v1058 = vpop.permute.xlu0 %1057
        %1059 = vrot.lane.b32.xlu0 %v763, 12
        %v1060 = vpop.permute.xlu0 %1059
        %v1085 = vrot.slane %v762, 1
        %v1086 = vrot.slane %v763, 1
        %v1087 = vsel %vm785, %v1085, %v1086
        %1088 = vrot.lane.b32.xlu0 %v789, 16
        %v1089 = vpop.permute.xlu0 %1088
        %1090 = vrot.lane.b32.xlu0 %v791, 16
        %v1091 = vpop.permute.xlu0 %1090
        %1092 = vrot.lane.b32.xlu0 %v790, 16
        %v1093 = vpop.permute.xlu0 %1092
        %1094 = vrot.lane.b32.xlu0 %v792, 16
        %v1095 = vpop.permute.xlu0 %1094
        %1096 = vrot.lane.b32.xlu0 %v794, 16
        %v1097 = vpop.permute.xlu0 %1096
        %1098 = vrot.lane.b32.xlu0 %v793, 16
        %v1099 = vpop.permute.xlu0 %1098
        %1100 = vrot.lane.b32.xlu0 %v795, 16
        %v1101 = vpop.permute.xlu0 %1100
        %1102 = vrot.lane.b32.xlu0 %v797, 16
        %v1103 = vpop.permute.xlu0 %1102
        %1104 = vrot.lane.b32.xlu0 %v796, 16
        %v1105 = vpop.permute.xlu0 %1104
        %1106 = vrot.lane.b32.xlu0 %v798, 16
        %v1107 = vpop.permute.xlu0 %1106
        %1108 = vrot.lane.b32.xlu0 %v800, 16
        %v1109 = vpop.permute.xlu0 %1108
        %1110 = vrot.lane.b32.xlu0 %v799, 16
        %v1111 = vpop.permute.xlu0 %1110
        %1112 = vrot.lane.b32.xlu0 %v801, 16
        %v1113 = vpop.permute.xlu0 %1112
        %1114 = vrot.lane.b32.xlu0 %v803, 16
        %v1115 = vpop.permute.xlu0 %1114
        %1116 = vrot.lane.b32.xlu0 %v802, 16
        %v1117 = vpop.permute.xlu0 %1116
        %1118 = vrot.lane.b32.xlu0 %v804, 16
        %v1119 = vpop.permute.xlu0 %1118
        %1120 = vrot.lane.b32.xlu0 %v806, 16
        %v1121 = vpop.permute.xlu0 %1120
        %1122 = vrot.lane.b32.xlu0 %v805, 16
        %v1123 = vpop.permute.xlu0 %1122
        %1124 = vrot.lane.b32.xlu0 %v807, 16
        %v1125 = vpop.permute.xlu0 %1124
        %1126 = vrot.lane.b32.xlu0 %v809, 16
        %v1127 = vpop.permute.xlu0 %1126
        %1128 = vrot.lane.b32.xlu0 %v808, 16
        %v1129 = vpop.permute.xlu0 %1128
        %1130 = vrot.lane.b32.xlu0 %v1085, 16
        %v1131 = vpop.permute.xlu0 %1130
        %1132 = vrot.lane.b32.xlu0 %v1087, 16
        %v1133 = vpop.permute.xlu0 %1132
        %1134 = vrot.lane.b32.xlu0 %v1086, 16
        %v1135 = vpop.permute.xlu0 %1134
        %v1161 = vrot.slane %v762, 2
        %v1162 = vrot.slane %v763, 2
        %v1163 = vsel %vm890, %v1161, %v1162
        %v1164 = vrot.slane %v764, 2
        %v1165 = vsel %vm890, %v1162, %v1164
        %1166 = vrot.lane.b32.xlu0 %v896, 20
        %v1167 = vpop.permute.xlu0 %1166
        %1168 = vrot.lane.b32.xlu0 %v898, 20
        %v1169 = vpop.permute.xlu0 %1168
        %1170 = vrot.lane.b32.xlu0 %v900, 20
        %v1171 = vpop.permute.xlu0 %1170
        %1172 = vrot.lane.b32.xlu0 %v901, 20
        %v1173 = vpop.permute.xlu0 %1172
        %1174 = vrot.lane.b32.xlu0 %v903, 20
        %v1175 = vpop.permute.xlu0 %1174
        %1176 = vrot.lane.b32.xlu0 %v905, 20
        %v1177 = vpop.permute.xlu0 %1176
        %1178 = vrot.lane.b32.xlu0 %v906, 20
        %v1179 = vpop.permute.xlu0 %1178
        %1180 = vrot.lane.b32.xlu0 %v908, 20
        %v1181 = vpop.permute.xlu0 %1180
        %1182 = vrot.lane.b32.xlu0 %v910, 20
        %v1183 = vpop.permute.xlu0 %1182
        %1184 = vrot.lane.b32.xlu0 %v911, 20
        %v1185 = vpop.permute.xlu0 %1184
        %1186 = vrot.lane.b32.xlu0 %v913, 20
        %v1187 = vpop.permute.xlu0 %1186
        %1188 = vrot.lane.b32.xlu0 %v915, 20
        %v1189 = vpop.permute.xlu0 %1188
        %1190 = vrot.lane.b32.xlu0 %v916, 20
        %v1191 = vpop.permute.xlu0 %1190
        %1192 = vrot.lane.b32.xlu0 %v918, 20
        %v1193 = vpop.permute.xlu0 %1192
        %1194 = vrot.lane.b32.xlu0 %v920, 20
        %v1195 = vpop.permute.xlu0 %1194
        %1196 = vrot.lane.b32.xlu0 %v921, 20
        %v1197 = vpop.permute.xlu0 %1196
        %1198 = vrot.lane.b32.xlu0 %v923, 20
        %v1199 = vpop.permute.xlu0 %1198
        %1200 = vrot.lane.b32.xlu0 %v925, 20
        %v1201 = vpop.permute.xlu0 %1200
        %1202 = vrot.lane.b32.xlu0 %v926, 20
        %v1203 = vpop.permute.xlu0 %1202
        %1204 = vrot.lane.b32.xlu0 %v928, 20
        %v1205 = vpop.permute.xlu0 %1204
        %1206 = vrot.lane.b32.xlu0 %v930, 20
        %v1207 = vpop.permute.xlu0 %1206
        %1208 = vrot.lane.b32.xlu0 %v1161, 20
        %v1209 = vpop.permute.xlu0 %1208
        %1210 = vrot.lane.b32.xlu0 %v1163, 20
        %v1211 = vpop.permute.xlu0 %1210
        %1212 = vrot.lane.b32.xlu0 %v1165, 20
        %v1213 = vpop.permute.xlu0 %1212
        %1241 = vrot.lane.b32.xlu0 %v737, 24
        %v1242 = vpop.permute.xlu0 %1241
        %1243 = vrot.lane.b32.xlu0 %v738, 24
        %v1244 = vpop.permute.xlu0 %1243
        %1245 = vrot.lane.b32.xlu0 %v739, 24
        %v1246 = vpop.permute.xlu0 %1245
        %1247 = vrot.lane.b32.xlu0 %v741, 24
        %v1248 = vpop.permute.xlu0 %1247
        %1249 = vrot.lane.b32.xlu0 %v742, 24
        %v1250 = vpop.permute.xlu0 %1249
        %1251 = vrot.lane.b32.xlu0 %v743, 24
        %v1252 = vpop.permute.xlu0 %1251
        %1253 = vrot.lane.b32.xlu0 %v745, 24
        %v1254 = vpop.permute.xlu0 %1253
        %1255 = vrot.lane.b32.xlu0 %v746, 24
        %v1256 = vpop.permute.xlu0 %1255
        %1257 = vrot.lane.b32.xlu0 %v747, 24
        %v1258 = vpop.permute.xlu0 %1257
        %1259 = vrot.lane.b32.xlu0 %v749, 24
        %v1260 = vpop.permute.xlu0 %1259
        %1261 = vrot.lane.b32.xlu0 %v750, 24
        %v1262 = vpop.permute.xlu0 %1261
        %1263 = vrot.lane.b32.xlu0 %v751, 24
        %v1264 = vpop.permute.xlu0 %1263
        %1265 = vrot.lane.b32.xlu0 %v753, 24
        %v1266 = vpop.permute.xlu0 %1265
        %1267 = vrot.lane.b32.xlu0 %v754, 24
        %v1268 = vpop.permute.xlu0 %1267
        %1269 = vrot.lane.b32.xlu0 %v755, 24
        %v1270 = vpop.permute.xlu0 %1269
        %1271 = vrot.lane.b32.xlu0 %v757, 24
        %v1272 = vpop.permute.xlu0 %1271
        %1273 = vrot.lane.b32.xlu0 %v758, 24
        %v1274 = vpop.permute.xlu0 %1273
        %1275 = vrot.lane.b32.xlu0 %v759, 24
        %v1276 = vpop.permute.xlu0 %1275
        %1277 = vrot.lane.b32.xlu0 %v761, 24
        %v1278 = vpop.permute.xlu0 %1277
        %1279 = vrot.lane.b32.xlu0 %v762, 24
        %v1280 = vpop.permute.xlu0 %1279
        %1281 = vrot.lane.b32.xlu0 %v763, 24
        %v1282 = vpop.permute.xlu0 %1281
        %1283 = vrot.lane.b32.xlu0 %v765, 24
        %v1284 = vpop.permute.xlu0 %1283
        %1285 = vrot.lane.b32.xlu0 %v766, 24
        %v1286 = vpop.permute.xlu0 %1285
        %1287 = vrot.lane.b32.xlu0 %v767, 24
        %v1288 = vpop.permute.xlu0 %1287
        %v1313 = vrot.slane %v766, 1
        %v1314 = vrot.slane %v767, 1
        %v1315 = vsel %vm785, %v1313, %v1314
        %1316 = vrot.lane.b32.xlu0 %v792, 28
        %v1317 = vpop.permute.xlu0 %1316
        %1318 = vrot.lane.b32.xlu0 %v794, 28
        %v1319 = vpop.permute.xlu0 %1318
        %1320 = vrot.lane.b32.xlu0 %v793, 28
        %v1321 = vpop.permute.xlu0 %1320
        %1322 = vrot.lane.b32.xlu0 %v795, 28
        %v1323 = vpop.permute.xlu0 %1322
        %1324 = vrot.lane.b32.xlu0 %v797, 28
        %v1325 = vpop.permute.xlu0 %1324
        %1326 = vrot.lane.b32.xlu0 %v796, 28
        %v1327 = vpop.permute.xlu0 %1326
        %1328 = vrot.lane.b32.xlu0 %v798, 28
        %v1329 = vpop.permute.xlu0 %1328
        %1330 = vrot.lane.b32.xlu0 %v800, 28
        %v1331 = vpop.permute.xlu0 %1330
        %1332 = vrot.lane.b32.xlu0 %v799, 28
        %v1333 = vpop.permute.xlu0 %1332
        %1334 = vrot.lane.b32.xlu0 %v801, 28
        %v1335 = vpop.permute.xlu0 %1334
        %1336 = vrot.lane.b32.xlu0 %v803, 28
        %v1337 = vpop.permute.xlu0 %1336
        %1338 = vrot.lane.b32.xlu0 %v802, 28
        %v1339 = vpop.permute.xlu0 %1338
        %1340 = vrot.lane.b32.xlu0 %v804, 28
        %v1341 = vpop.permute.xlu0 %1340
        %1342 = vrot.lane.b32.xlu0 %v806, 28
        %v1343 = vpop.permute.xlu0 %1342
        %1344 = vrot.lane.b32.xlu0 %v805, 28
        %v1345 = vpop.permute.xlu0 %1344
        %1346 = vrot.lane.b32.xlu0 %v807, 28
        %v1347 = vpop.permute.xlu0 %1346
        %1348 = vrot.lane.b32.xlu0 %v809, 28
        %v1349 = vpop.permute.xlu0 %1348
        %1350 = vrot.lane.b32.xlu0 %v808, 28
        %v1351 = vpop.permute.xlu0 %1350
        %1352 = vrot.lane.b32.xlu0 %v1085, 28
        %v1353 = vpop.permute.xlu0 %1352
        %1354 = vrot.lane.b32.xlu0 %v1087, 28
        %v1355 = vpop.permute.xlu0 %1354
        %1356 = vrot.lane.b32.xlu0 %v1086, 28
        %v1357 = vpop.permute.xlu0 %1356
        %1358 = vrot.lane.b32.xlu0 %v1313, 28
        %v1359 = vpop.permute.xlu0 %1358
        %1360 = vrot.lane.b32.xlu0 %v1315, 28
        %v1361 = vpop.permute.xlu0 %1360
        %1362 = vrot.lane.b32.xlu0 %v1314, 28
        %v1363 = vpop.permute.xlu0 %1362
        %v1389 = vrot.slane %v766, 2
        %v1390 = vrot.slane %v767, 2
        %v1391 = vsel %vm890, %v1389, %v1390
        %v1392 = vrot.slane %v768, 2
        %v1393 = vsel %vm890, %v1390, %v1392
        %1394 = vrot.lane.b32.xlu0 %v901, 32
        %v1395 = vpop.permute.xlu0 %1394
        %1396 = vrot.lane.b32.xlu0 %v903, 32
        %v1397 = vpop.permute.xlu0 %1396
        %1398 = vrot.lane.b32.xlu0 %v905, 32
        %v1399 = vpop.permute.xlu0 %1398
        %1400 = vrot.lane.b32.xlu0 %v906, 32
        %v1401 = vpop.permute.xlu0 %1400
        %1402 = vrot.lane.b32.xlu0 %v908, 32
        %v1403 = vpop.permute.xlu0 %1402
        %1404 = vrot.lane.b32.xlu0 %v910, 32
        %v1405 = vpop.permute.xlu0 %1404
        %1406 = vrot.lane.b32.xlu0 %v911, 32
        %v1407 = vpop.permute.xlu0 %1406
        %1408 = vrot.lane.b32.xlu0 %v913, 32
        %v1409 = vpop.permute.xlu0 %1408
        %1410 = vrot.lane.b32.xlu0 %v915, 32
        %v1411 = vpop.permute.xlu0 %1410
        %1412 = vrot.lane.b32.xlu0 %v916, 32
        %v1413 = vpop.permute.xlu0 %1412
        %1414 = vrot.lane.b32.xlu0 %v918, 32
        %v1415 = vpop.permute.xlu0 %1414
        %1416 = vrot.lane.b32.xlu0 %v920, 32
        %v1417 = vpop.permute.xlu0 %1416
        %1418 = vrot.lane.b32.xlu0 %v921, 32
        %v1419 = vpop.permute.xlu0 %1418
        %1420 = vrot.lane.b32.xlu0 %v923, 32
        %v1421 = vpop.permute.xlu0 %1420
        %1422 = vrot.lane.b32.xlu0 %v925, 32
        %v1423 = vpop.permute.xlu0 %1422
        %1424 = vrot.lane.b32.xlu0 %v926, 32
        %v1425 = vpop.permute.xlu0 %1424
        %1426 = vrot.lane.b32.xlu0 %v928, 32
        %v1427 = vpop.permute.xlu0 %1426
        %1428 = vrot.lane.b32.xlu0 %v930, 32
        %v1429 = vpop.permute.xlu0 %1428
        %1430 = vrot.lane.b32.xlu0 %v1161, 32
        %v1431 = vpop.permute.xlu0 %1430
        %1432 = vrot.lane.b32.xlu0 %v1163, 32
        %v1433 = vpop.permute.xlu0 %1432
        %1434 = vrot.lane.b32.xlu0 %v1165, 32
        %v1435 = vpop.permute.xlu0 %1434
        %1436 = vrot.lane.b32.xlu0 %v1389, 32
        %v1437 = vpop.permute.xlu0 %1436
        %1438 = vrot.lane.b32.xlu0 %v1391, 32
        %v1439 = vpop.permute.xlu0 %1438
        %1440 = vrot.lane.b32.xlu0 %v1393, 32
        %v1441 = vpop.permute.xlu0 %1440
        %v1466 = vsel %vm420, %v729, %v811
        %v1467 = vsel %vm420, %v730, %v813
        %v1468 = vsel %vm420, %v731, %v815
        %v1469 = vsel %vm420, %v733, %v817
        %v1470 = vsel %vm420, %v734, %v819
        %v1471 = vsel %vm420, %v735, %v821
        %v1472 = vsel %vm420, %v737, %v823
        %v1473 = vsel %vm420, %v738, %v825
        %v1474 = vsel %vm420, %v739, %v827
        %v1475 = vsel %vm420, %v741, %v829
        %v1476 = vsel %vm420, %v742, %v831
        %v1477 = vsel %vm420, %v743, %v833
        %v1478 = vsel %vm420, %v745, %v835
        %v1479 = vsel %vm420, %v746, %v837
        %v1480 = vsel %vm420, %v747, %v839
        %v1481 = vsel %vm420, %v749, %v841
        %v1482 = vsel %vm420, %v750, %v843
        %v1483 = vsel %vm420, %v751, %v845
        %v1484 = vsel %vm420, %v753, %v847
        %v1485 = vsel %vm420, %v754, %v849
        %v1486 = vsel %vm420, %v755, %v851
        %v1487 = vsel %vm420, %v757, %v853
        %v1488 = vsel %vm420, %v758, %v855
        %v1489 = vsel %vm420, %v759, %v857
        %vm1490 = vcmask 64512
        %v1491 = vsel %vm1490, %v1466, %v932
        %v1492 = vsel %vm1490, %v1467, %v934
        %v1493 = vsel %vm1490, %v1468, %v936
        %v1494 = vsel %vm1490, %v1469, %v938
        %v1495 = vsel %vm1490, %v1470, %v940
        %v1496 = vsel %vm1490, %v1471, %v942
        %v1497 = vsel %vm1490, %v1472, %v944
        %v1498 = vsel %vm1490, %v1473, %v946
        %v1499 = vsel %vm1490, %v1474, %v948
        %v1500 = vsel %vm1490, %v1475, %v950
        %v1501 = vsel %vm1490, %v1476, %v952
        %v1502 = vsel %vm1490, %v1477, %v954
        %v1503 = vsel %vm1490, %v1478, %v956
        %v1504 = vsel %vm1490, %v1479, %v958
        %v1505 = vsel %vm1490, %v1480, %v960
        %v1506 = vsel %vm1490, %v1481, %v962
        %v1507 = vsel %vm1490, %v1482, %v964
        %v1508 = vsel %vm1490, %v1483, %v966
        %v1509 = vsel %vm1490, %v1484, %v968
        %v1510 = vsel %vm1490, %v1485, %v970
        %v1511 = vsel %vm1490, %v1486, %v972
        %v1512 = vsel %vm1490, %v1487, %v974
        %v1513 = vsel %vm1490, %v1488, %v976
        %v1514 = vsel %vm1490, %v1489, %v978
        %vm1515 = vcmask 97280
        %v1516 = vsel %vm1515, %v1491, %v1014
        %v1517 = vsel %vm1515, %v1492, %v1016
        %v1518 = vsel %vm1515, %v1493, %v1018
        %v1519 = vsel %vm1515, %v1494, %v1020
        %v1520 = vsel %vm1515, %v1495, %v1022
        %v1521 = vsel %vm1515, %v1496, %v1024
        %v1522 = vsel %vm1515, %v1497, %v1026
        %v1523 = vsel %vm1515, %v1498, %v1028
        %v1524 = vsel %vm1515, %v1499, %v1030
        %v1525 = vsel %vm1515, %v1500, %v1032
        %v1526 = vsel %vm1515, %v1501, %v1034
        %v1527 = vsel %vm1515, %v1502, %v1036
        %v1528 = vsel %vm1515, %v1503, %v1038
        %v1529 = vsel %vm1515, %v1504, %v1040
        %v1530 = vsel %vm1515, %v1505, %v1042
        %v1531 = vsel %vm1515, %v1506, %v1044
        %v1532 = vsel %vm1515, %v1507, %v1046
        %v1533 = vsel %vm1515, %v1508, %v1048
        %v1534 = vsel %vm1515, %v1509, %v1050
        %v1535 = vsel %vm1515, %v1510, %v1052
        %v1536 = vsel %vm1515, %v1511, %v1054
        %v1537 = vsel %vm1515, %v1512, %v1056
        %v1538 = vsel %vm1515, %v1513, %v1058
        %v1539 = vsel %vm1515, %v1514, %v1060
        %vm1540 = vcmask 130048
        %v1541 = vsel %vm1540, %v1516, %v1089
        %v1542 = vsel %vm1540, %v1517, %v1091
        %v1543 = vsel %vm1540, %v1518, %v1093
        %v1544 = vsel %vm1540, %v1519, %v1095
        %v1545 = vsel %vm1540, %v1520, %v1097
        %v1546 = vsel %vm1540, %v1521, %v1099
        %v1547 = vsel %vm1540, %v1522, %v1101
        %v1548 = vsel %vm1540, %v1523, %v1103
        %v1549 = vsel %vm1540, %v1524, %v1105
        %v1550 = vsel %vm1540, %v1525, %v1107
        %v1551 = vsel %vm1540, %v1526, %v1109
        %v1552 = vsel %vm1540, %v1527, %v1111
        %v1553 = vsel %vm1540, %v1528, %v1113
        %v1554 = vsel %vm1540, %v1529, %v1115
        %v1555 = vsel %vm1540, %v1530, %v1117
        %v1556 = vsel %vm1540, %v1531, %v1119
        %v1557 = vsel %vm1540, %v1532, %v1121
        %v1558 = vsel %vm1540, %v1533, %v1123
        %v1559 = vsel %vm1540, %v1534, %v1125
        %v1560 = vsel %vm1540, %v1535, %v1127
        %v1561 = vsel %vm1540, %v1536, %v1129
        %v1562 = vsel %vm1540, %v1537, %v1131
        %v1563 = vsel %vm1540, %v1538, %v1133
        %v1564 = vsel %vm1540, %v1539, %v1135
        %vm1565 = vcmask 162816
        %v1566 = vsel %vm1565, %v1541, %v1167
        %v1567 = vsel %vm1565, %v1542, %v1169
        %v1568 = vsel %vm1565, %v1543, %v1171
        %v1569 = vsel %vm1565, %v1544, %v1173
        %v1570 = vsel %vm1565, %v1545, %v1175
        %v1571 = vsel %vm1565, %v1546, %v1177
        %v1572 = vsel %vm1565, %v1547, %v1179
        %v1573 = vsel %vm1565, %v1548, %v1181
        %v1574 = vsel %vm1565, %v1549, %v1183
        %v1575 = vsel %vm1565, %v1550, %v1185
        %v1576 = vsel %vm1565, %v1551, %v1187
        %v1577 = vsel %vm1565, %v1552, %v1189
        %v1578 = vsel %vm1565, %v1553, %v1191
        %v1579 = vsel %vm1565, %v1554, %v1193
        %v1580 = vsel %vm1565, %v1555, %v1195
        %v1581 = vsel %vm1565, %v1556, %v1197
        %v1582 = vsel %vm1565, %v1557, %v1199
        %v1583 = vsel %vm1565, %v1558, %v1201
        %v1584 = vsel %vm1565, %v1559, %v1203
        %v1585 = vsel %vm1565, %v1560, %v1205
        %v1586 = vsel %vm1565, %v1561, %v1207
        %v1587 = vsel %vm1565, %v1562, %v1209
        %v1588 = vsel %vm1565, %v1563, %v1211
        %v1589 = vsel %vm1565, %v1564, %v1213
        %vm1590 = vcmask 195584
        %v1591 = vsel %vm1590, %v1566, %v1242
        %v1592 = vsel %vm1590, %v1567, %v1244
        %v1593 = vsel %vm1590, %v1568, %v1246
        %v1594 = vsel %vm1590, %v1569, %v1248
        %v1595 = vsel %vm1590, %v1570, %v1250
        %v1596 = vsel %vm1590, %v1571, %v1252
        %v1597 = vsel %vm1590, %v1572, %v1254
        %v1598 = vsel %vm1590, %v1573, %v1256
        %v1599 = vsel %vm1590, %v1574, %v1258
        %v1600 = vsel %vm1590, %v1575, %v1260
        %v1601 = vsel %vm1590, %v1576, %v1262
        %v1602 = vsel %vm1590, %v1577, %v1264
        %v1603 = vsel %vm1590, %v1578, %v1266
        %v1604 = vsel %vm1590, %v1579, %v1268
        %v1605 = vsel %vm1590, %v1580, %v1270
        %v1606 = vsel %vm1590, %v1581, %v1272
        %v1607 = vsel %vm1590, %v1582, %v1274
        %v1608 = vsel %vm1590, %v1583, %v1276
        %v1609 = vsel %vm1590, %v1584, %v1278
        %v1610 = vsel %vm1590, %v1585, %v1280
        %v1611 = vsel %vm1590, %v1586, %v1282
        %v1612 = vsel %vm1590, %v1587, %v1284
        %v1613 = vsel %vm1590, %v1588, %v1286
        %v1614 = vsel %vm1590, %v1589, %v1288
        %vm1615 = vcmask 228352
        %v1616 = vsel %vm1615, %v1591, %v1317
        %v1617 = vsel %vm1615, %v1592, %v1319
        %v1618 = vsel %vm1615, %v1593, %v1321
        %v1619 = vsel %vm1615, %v1594, %v1323
        %v1620 = vsel %vm1615, %v1595, %v1325
        %v1621 = vsel %vm1615, %v1596, %v1327
        %v1622 = vsel %vm1615, %v1597, %v1329
        %v1623 = vsel %vm1615, %v1598, %v1331
        %v1624 = vsel %vm1615, %v1599, %v1333
        %v1625 = vsel %vm1615, %v1600, %v1335
        %v1626 = vsel %vm1615, %v1601, %v1337
        %v1627 = vsel %vm1615, %v1602, %v1339
        %v1628 = vsel %vm1615, %v1603, %v1341
        %v1629 = vsel %vm1615, %v1604, %v1343
        %v1630 = vsel %vm1615, %v1605, %v1345
        %v1631 = vsel %vm1615, %v1606, %v1347
        %v1632 = vsel %vm1615, %v1607, %v1349
        %v1633 = vsel %vm1615, %v1608, %v1351
        %v1634 = vsel %vm1615, %v1609, %v1353
        %v1635 = vsel %vm1615, %v1610, %v1355
        %v1636 = vsel %vm1615, %v1611, %v1357
        %v1637 = vsel %vm1615, %v1612, %v1359
        %v1638 = vsel %vm1615, %v1613, %v1361
        %v1639 = vsel %vm1615, %v1614, %v1363
        %vm1640 = vcmask 261120
        %v1641 = vsel %vm1640, %v1616, %v1395
        %v1642 = vsel %vm1640, %v1617, %v1397
        %v1643 = vsel %vm1640, %v1618, %v1399
        %v1644 = vsel %vm1640, %v1619, %v1401
        %v1645 = vsel %vm1640, %v1620, %v1403
        %v1646 = vsel %vm1640, %v1621, %v1405
        %v1647 = vsel %vm1640, %v1622, %v1407
        %v1648 = vsel %vm1640, %v1623, %v1409
        %v1649 = vsel %vm1640, %v1624, %v1411
        %v1650 = vsel %vm1640, %v1625, %v1413
        %v1651 = vsel %vm1640, %v1626, %v1415
        %v1652 = vsel %vm1640, %v1627, %v1417
        %v1653 = vsel %vm1640, %v1628, %v1419
        %v1654 = vsel %vm1640, %v1629, %v1421
        %v1655 = vsel %vm1640, %v1630, %v1423
        %v1656 = vsel %vm1640, %v1631, %v1425
        %v1657 = vsel %vm1640, %v1632, %v1427
        %v1658 = vsel %vm1640, %v1633, %v1429
        %v1659 = vsel %vm1640, %v1634, %v1431
        %v1660 = vsel %vm1640, %v1635, %v1433
        %v1661 = vsel %vm1640, %v1636, %v1435
        %v1662 = vsel %vm1640, %v1637, %v1437
        %v1663 = vsel %vm1640, %v1638, %v1439
        %v1664 = vsel %vm1640, %v1639, %v1441
        %vm1689 = vcmask 1040384
        %v1690 = vrot.slane %v1641, 7
        %v1691 = vrot.slane %v1642, 7
        %v1692 = vsel %vm1689, %v1690, %v1691
        %v1693 = vrot.slane %v1643, 7
        %v1694 = vsel %vm1689, %v1691, %v1693
        %v1695 = vrot.slane %v1644, 7
        %v1696 = vrot.slane %v1645, 7
        %v1697 = vsel %vm1689, %v1695, %v1696
        %v1698 = vrot.slane %v1646, 7
        %v1699 = vsel %vm1689, %v1696, %v1698
        %v1700 = vrot.slane %v1647, 7
        %v1701 = vrot.slane %v1648, 7
        %v1702 = vsel %vm1689, %v1700, %v1701
        %v1703 = vrot.slane %v1649, 7
        %v1704 = vsel %vm1689, %v1701, %v1703
        %v1705 = vrot.slane %v1650, 7
        %v1706 = vrot.slane %v1651, 7
        %v1707 = vsel %vm1689, %v1705, %v1706
        %v1708 = vrot.slane %v1652, 7
        %v1709 = vsel %vm1689, %v1706, %v1708
        %v1710 = vrot.slane %v1653, 7
        %v1711 = vrot.slane %v1654, 7
        %v1712 = vsel %vm1689, %v1710, %v1711
        %v1713 = vrot.slane %v1655, 7
        %v1714 = vsel %vm1689, %v1711, %v1713
        %v1715 = vrot.slane %v1656, 7
        %v1716 = vrot.slane %v1657, 7
        %v1717 = vsel %vm1689, %v1715, %v1716
        %v1718 = vrot.slane %v1658, 7
        %v1719 = vsel %vm1689, %v1716, %v1718
        %v1720 = vrot.slane %v1659, 7
        %v1721 = vrot.slane %v1660, 7
        %v1722 = vsel %vm1689, %v1720, %v1721
        %v1723 = vrot.slane %v1661, 7
        %v1724 = vsel %vm1689, %v1721, %v1723
        %v1725 = vrot.slane %v1662, 7
        %v1726 = vrot.slane %v1663, 7
        %v1727 = vsel %vm1689, %v1725, %v1726
        %v1728 = vrot.slane %v1664, 7
        %v1729 = vsel %vm1689, %v1726, %v1728
        %v1730 = vld [vmem:[#allocation9] sm:$0xff]
        %v1731 = vld [vmem:[#allocation9 + $0x8] sm:$0xff]
        %v1732 = vld [vmem:[#allocation9 + $0x10] sm:$0xff]
        %v1733 = vld [vmem:[#allocation9 + $0x18] sm:$0xff]
        %v1734 = vld [vmem:[#allocation9 + $0x20] sm:$0xf]
        %v1735 = vld [vmem:[#allocation11] sm:$0x1]
        %v1737 = vlaneseq
        %v1738 = vshrl.u32 %v1737, 7
        %v1739 = vsub.s32 0, %v1738
        %v1740 = vrot.slane %v1735, %v1739
        %vm1742 = vcmask 293888
        %v1743 = vsel %vm1742, %v1692, 0
        %v1745 = vsel %vm1742, %v1694, 0
        %v1747 = vsel %vm1742, %v1697, 0
        %v1749 = vsel %vm1742, %v1699, 0
        %v1751 = vsel %vm1742, %v1702, 0
        %v1753 = vsel %vm1742, %v1704, 0
        %v1755 = vsel %vm1742, %v1707, 0
        %v1757 = vsel %vm1742, %v1709, 0
        %v1759 = vsel %vm1742, %v1712, 0
        %v1761 = vsel %vm1742, %v1714, 0
        %v1763 = vsel %vm1742, %v1717, 0
        %v1765 = vsel %vm1742, %v1719, 0
        %v1767 = vsel %vm1742, %v1722, 0
        %v1769 = vsel %vm1742, %v1724, 0
        %v1771 = vsel %vm1742, %v1727, 0
        %v1773 = vsel %vm1742, %v1729, 0
        %v1776 = vsel %vm481, %v1734, 0
        %1778 = vmatprep.subr.mxu0 0.0
        %1779 = vmatpush1.msra.mxu0 %v1730
        %1780 = vmatprep.subr.mxu0 0.0
        %1781 = vmatpush1.msra.mxu0 %v1731
        %1782 = vmatprep.subr.mxu0 0.0
        %1783 = vmatpush1.msra.mxu0 %v1732
        %1784 = vmatprep.subr.mxu0 0.0
        %1785 = vmatpush1.msra.mxu0 %v1733
        %1786 = vmatprep.subr.mxu0 0.0
        %1787 = vmatpush1.msra.mxu0 %v1776
        %1788 = vmatprep.subr.mxu0 0.0
        %1789 = vmatpush1.msra.mxu0 0.0
        %1790 = vmatprep.subr.mxu0 0.0
        %1791 = vmatpush1.msra.mxu0 0.0
        %1792 = vmatprep.subr.mxu0 0.0
        %1793 = vmatpush1.msra.mxu0 0.0
        %1794 = vmatprep.subr.mxu0 0.0
        %1795 = vmatpush1.msra.mxu0 0.0
        %1796 = vmatprep.subr.mxu0 0.0
        %1797 = vmatpush1.msra.mxu0 0.0
        %1798 = vmatprep.subr.mxu0 0.0
        %1799 = vmatpush1.msra.mxu0 0.0
        %1800 = vmatprep.subr.mxu0 0.0
        %1801 = vmatpush1.msra.mxu0 0.0
        %1802 = vmatprep.subr.mxu0 0.0
        %1803 = vmatpush1.msra.mxu0 0.0
        %1804 = vmatprep.subr.mxu0 0.0
        %1805 = vmatpush1.msra.mxu0 0.0
        %1806 = vmatprep.subr.mxu0 0.0
        %1807 = vmatpush1.msra.mxu0 0.0
        %1808 = vmatprep.subr.mxu0 0.0
        %1809 = vmatpush1.msra.mxu0 0.0
        %1810 = vmatprep.subr.mxu0 0.0
        %1811 = vmatpush1.msra.mxu0 0.0
        %1812 = vmatprep.subr.mxu0 0.0
        %1813 = vmatpush1.msra.mxu0 0.0
        %1814 = vmatprep.subr.mxu0 0.0
        %1815 = vmatpush1.msra.mxu0 0.0
        %1816 = vmatprep.subr.mxu0 0.0
        %1817 = vmatpush1.msra.mxu0 0.0
        %1818 = vmatprep.subr.mxu0 0.0
        %1819 = vmatpush1.msra.mxu0 0.0
        %1820 = vmatprep.subr.mxu0 0.0
        %1821 = vmatpush1.msra.mxu0 0.0
        %1822 = vmatprep.subr.mxu0 0.0
        %1823 = vmatpush1.msra.mxu0 0.0
        %1824 = vmatprep.subr.mxu0 0.0
        %1825 = vmatpush1.msra.mxu0 0.0
        %1826 = vmatprep.subr.mxu0 0.0
        %1827 = vmatpush1.msra.mxu0 0.0
        %1828 = vmatprep.subr.mxu0 0.0
        %1829 = vmatpush1.msra.mxu0 0.0
        %1830 = vmatprep.subr.mxu0 0.0
        %1831 = vmatpush1.msra.mxu0 0.0
        %1832 = vmatprep.subr.mxu0 0.0
        %1833 = vmatpush1.msra.mxu0 0.0
        %1834 = vmatprep.subr.mxu0 0.0
        %1835 = vmatpush1.msra.mxu0 0.0
        %1836 = vmatprep.subr.mxu0 0.0
        %1837 = vmatpush1.msra.mxu0 0.0
        %1838 = vmatprep.subr.mxu0 0.0
        %1839 = vmatpush1.msra.mxu0 0.0
        %1840 = vmatprep.subr.mxu0 0.0
        %1841 = vmatpush1.msra.mxu0 0.0
        %1842 = vmatprep.mubr.f32.mxu0 0.0
        %1843 = vmatmul.mubr.f32.gmra.mrb[0].mxu0 %v1743
        %v1844 = vpop.f32.mrb[0].mxu0
        %v1845 = vadd.f32 %v1740, %v1844
        %v1846 = vpop.f32.mrb[0].mxu0
        %1847 = vmatprep.mubr.f32.mxu0 0.0
        %1848 = vmatmul.mubr.f32.gmra.mrb[0].mxu0 %v1745
        %v1849 = vpop.f32.mrb[0].mxu0
        %v1850 = vadd.f32 %v1740, %v1849
        %v1851 = vpop.f32.mrb[0].mxu0
        %1852 = vmatprep.mubr.f32.mxu0 0.0
        %1853 = vmatmul.mubr.f32.gmra.mrb[0].mxu0 %v1747
        %v1854 = vpop.f32.mrb[0].mxu0
        %v1855 = vadd.f32 %v1740, %v1854
        %v1856 = vpop.f32.mrb[0].mxu0
        %1857 = vmatprep.mubr.f32.mxu0 0.0
        %1858 = vmatmul.mubr.f32.gmra.mrb[0].mxu0 %v1749
        %v1859 = vpop.f32.mrb[0].mxu0
        %v1860 = vadd.f32 %v1740, %v1859
        %v1861 = vpop.f32.mrb[0].mxu0
        %1862 = vmatprep.mubr.f32.mxu0 0.0
        %1863 = vmatmul.mubr.f32.gmra.mrb[0].mxu0 %v1751
        %v1864 = vpop.f32.mrb[0].mxu0
        %v1865 = vadd.f32 %v1740, %v1864
        %v1866 = vpop.f32.mrb[0].mxu0
        %1867 = vmatprep.mubr.f32.mxu0 0.0
        %1868 = vmatmul.mubr.f32.gmra.mrb[0].mxu0 %v1753
        %v1869 = vpop.f32.mrb[0].mxu0
        %v1870 = vadd.f32 %v1740, %v1869
        %v1871 = vpop.f32.mrb[0].mxu0
        %1872 = vmatprep.mubr.f32.mxu0 0.0
        %1873 = vmatmul.mubr.f32.gmra.mrb[0].mxu0 %v1755
        %v1874 = vpop.f32.mrb[0].mxu0
        %v1875 = vadd.f32 %v1740, %v1874
        %v1876 = vpop.f32.mrb[0].mxu0
        %1877 = vmatprep.mubr.f32.mxu0 0.0
        %1878 = vmatmul.mubr.f32.gmra.mrb[0].mxu0 %v1757
        %v1879 = vpop.f32.mrb[0].mxu0
        %v1880 = vadd.f32 %v1740, %v1879
        %v1881 = vpop.f32.mrb[0].mxu0
        %1882 = vmatprep.mubr.f32.mxu0 0.0
        %1883 = vmatmul.mubr.f32.gmra.mrb[0].mxu0 %v1759
        %v1884 = vpop.f32.mrb[0].mxu0
        %v1885 = vadd.f32 %v1740, %v1884
        %v1886 = vpop.f32.mrb[0].mxu0
        %1887 = vmatprep.mubr.f32.mxu0 0.0
        %1888 = vmatmul.mubr.f32.gmra.mrb[0].mxu0 %v1761
        %v1889 = vpop.f32.mrb[0].mxu0
        %v1890 = vadd.f32 %v1740, %v1889
        %v1891 = vpop.f32.mrb[0].mxu0
        %1892 = vmatprep.mubr.f32.mxu0 0.0
        %1893 = vmatmul.mubr.f32.gmra.mrb[0].mxu0 %v1763
        %v1894 = vpop.f32.mrb[0].mxu0
        %v1895 = vadd.f32 %v1740, %v1894
        %v1896 = vpop.f32.mrb[0].mxu0
        %1897 = vmatprep.mubr.f32.mxu0 0.0
        %1898 = vmatmul.mubr.f32.gmra.mrb[0].mxu0 %v1765
        %v1899 = vpop.f32.mrb[0].mxu0
        %v1900 = vadd.f32 %v1740, %v1899
        %v1901 = vpop.f32.mrb[0].mxu0
        %1902 = vmatprep.mubr.f32.mxu0 0.0
        %1903 = vmatmul.mubr.f32.gmra.mrb[0].mxu0 %v1767
        %v1904 = vpop.f32.mrb[0].mxu0
        %v1905 = vadd.f32 %v1740, %v1904
        %v1906 = vpop.f32.mrb[0].mxu0
        %1907 = vmatprep.mubr.f32.mxu0 0.0
        %1908 = vmatmul.mubr.f32.gmra.mrb[0].mxu0 %v1769
        %v1909 = vpop.f32.mrb[0].mxu0
        %v1910 = vadd.f32 %v1740, %v1909
        %v1911 = vpop.f32.mrb[0].mxu0
        %1912 = vmatprep.mubr.f32.mxu0 0.0
        %1913 = vmatmul.mubr.f32.gmra.mrb[0].mxu0 %v1771
        %v1914 = vpop.f32.mrb[0].mxu0
        %v1915 = vadd.f32 %v1740, %v1914
        %v1916 = vpop.f32.mrb[0].mxu0
        %1917 = vmatprep.mubr.f32.mxu0 0.0
        %1918 = vmatmul.mubr.f32.gmra.mrb[0].mxu0 %v1773
        %v1919 = vpop.f32.mrb[0].mxu0
        %v1920 = vadd.f32 %v1740, %v1919
        %v1921 = vpop.f32.mrb[0].mxu0
        %1922 = vdwg.mxu0
        %v1923 = vmax.f32 %v1845, 0.0
        %v1924 = vmax.f32 %v1850, 0.0
        %v1925 = vmax.f32 %v1855, 0.0
        %v1926 = vmax.f32 %v1860, 0.0
        %v1927 = vmax.f32 %v1865, 0.0
        %v1928 = vmax.f32 %v1870, 0.0
        %v1929 = vmax.f32 %v1875, 0.0
        %v1930 = vmax.f32 %v1880, 0.0
        %v1931 = vmax.f32 %v1885, 0.0
        %v1932 = vmax.f32 %v1890, 0.0
        %v1933 = vmax.f32 %v1895, 0.0
        %v1934 = vmax.f32 %v1900, 0.0
        %v1935 = vmax.f32 %v1905, 0.0
        %v1936 = vmax.f32 %v1910, 0.0
        %v1937 = vmax.f32 %v1915, 0.0
        %v1938 = vmax.f32 %v1920, 0.0
        %s1939 = sadd.s32 %s389, 1
        %s1940 = smul.u32 %s1939, 16
        %s1941 = scalar_lea.vmem %s333, %s1940 [#allocation3]
        %v1942 = vld [vmem:[%s1941] sm:$0xff]
        %v1943 = vld [vmem:[%s1941 + $0x8] sm:$0xff]
        %v1944 = vld [vmem:[%s1941 + $0x10] sm:$0xff]
        %v1945 = vld [vmem:[%s1941 + $0x18] sm:$0xff]
        %v1946 = vld [vmem:[%s1941 + $0x20] sm:$0xff]
        %v1947 = vld [vmem:[%s1941 + $0x28] sm:$0xff]
        %v1948 = vld [vmem:[%s1941 + $0x30] sm:$0xff]
        %v1949 = vld [vmem:[%s1941 + $0x38] sm:$0xff]
        %v1950 = vld [vmem:[%s1941 + $0x40] sm:$0xff]
        %v1951 = vld [vmem:[%s1941 + $0x48] sm:$0xff]
        %v1952 = vld [vmem:[%s1941 + $0x50] sm:$0xff]
        %v1953 = vld [vmem:[%s1941 + $0x58] sm:$0xff]
        %v1954 = vld [vmem:[%s1941 + $0x60] sm:$0xff]
        %v1955 = vld [vmem:[%s1941 + $0x68] sm:$0xff]
        %v1956 = vld [vmem:[%s1941 + $0x70] sm:$0xff]
        %v1957 = vld [vmem:[%s1941 + $0x78] sm:$0xff]
        %1974 = vrot.lane.b32.xlu0 %v1942, 4
        %v1975 = vpop.permute.xlu0 %1974
        %1976 = vrot.lane.b32.xlu0 %v1943, 4
        %v1977 = vpop.permute.xlu0 %1976
        %1978 = vrot.lane.b32.xlu0 %v1944, 4
        %v1979 = vpop.permute.xlu0 %1978
        %1980 = vrot.lane.b32.xlu0 %v1945, 4
        %v1981 = vpop.permute.xlu0 %1980
        %1982 = vrot.lane.b32.xlu0 %v1946, 4
        %v1983 = vpop.permute.xlu0 %1982
        %1984 = vrot.lane.b32.xlu0 %v1947, 4
        %v1985 = vpop.permute.xlu0 %1984
        %1986 = vrot.lane.b32.xlu0 %v1948, 4
        %v1987 = vpop.permute.xlu0 %1986
        %1988 = vrot.lane.b32.xlu0 %v1949, 4
        %v1989 = vpop.permute.xlu0 %1988
        %1990 = vrot.lane.b32.xlu0 %v1950, 4
        %v1991 = vpop.permute.xlu0 %1990
        %1992 = vrot.lane.b32.xlu0 %v1951, 4
        %v1993 = vpop.permute.xlu0 %1992
        %1994 = vrot.lane.b32.xlu0 %v1952, 4
        %v1995 = vpop.permute.xlu0 %1994
        %1996 = vrot.lane.b32.xlu0 %v1953, 4
        %v1997 = vpop.permute.xlu0 %1996
        %1998 = vrot.lane.b32.xlu0 %v1954, 4
        %v1999 = vpop.permute.xlu0 %1998
        %2000 = vrot.lane.b32.xlu0 %v1955, 4
        %v2001 = vpop.permute.xlu0 %2000
        %2002 = vrot.lane.b32.xlu0 %v1956, 4
        %v2003 = vpop.permute.xlu0 %2002
        %2004 = vrot.lane.b32.xlu0 %v1957, 4
        %v2005 = vpop.permute.xlu0 %2004
        %v2022 = vsel %vm420, %v1923, %v1975
        %v2023 = vsel %vm420, %v1924, %v1977
        %v2024 = vsel %vm420, %v1925, %v1979
        %v2025 = vsel %vm420, %v1926, %v1981
        %v2026 = vsel %vm420, %v1927, %v1983
        %v2027 = vsel %vm420, %v1928, %v1985
        %v2028 = vsel %vm420, %v1929, %v1987
        %v2029 = vsel %vm420, %v1930, %v1989
        %v2030 = vsel %vm420, %v1931, %v1991
        %v2031 = vsel %vm420, %v1932, %v1993
        %v2032 = vsel %vm420, %v1933, %v1995
        %v2033 = vsel %vm420, %v1934, %v1997
        %v2034 = vsel %vm420, %v1935, %v1999
        %v2035 = vsel %vm420, %v1936, %v2001
        %v2036 = vsel %vm420, %v1937, %v2003
        %v2037 = vsel %vm420, %v1938, %v2005
        %v2038 = vld [vmem:[#allocation12] sm:$0xff]
        %v2039 = vld [vmem:[#allocation14] sm:$0x1]
        %v2041 = vlaneseq
        %v2042 = vshrl.u32 %v2041, 7
        %v2043 = vsub.s32 0, %v2042
        %v2044 = vrot.slane %v2039, %v2043
        %v2047 = vsel %vm1490, %v2022, 0
        %v2050 = vsel %vm1490, %v2023, 0
        %v2053 = vsel %vm1490, %v2024, 0
        %v2056 = vsel %vm1490, %v2025, 0
        %v2059 = vsel %vm1490, %v2026, 0
        %v2062 = vsel %vm1490, %v2027, 0
        %v2065 = vsel %vm1490, %v2028, 0
        %v2068 = vsel %vm1490, %v2029, 0
        %v2071 = vsel %vm1490, %v2030, 0
        %v2074 = vsel %vm1490, %v2031, 0
        %v2077 = vsel %vm1490, %v2032, 0
        %v2080 = vsel %vm1490, %v2033, 0
        %v2083 = vsel %vm1490, %v2034, 0
        %v2086 = vsel %vm1490, %v2035, 0
        %v2089 = vsel %vm1490, %v2036, 0
        %v2092 = vsel %vm1490, %v2037, 0
        %2094 = vmatprep.subr.mxu0 0.0
        %2095 = vmatpush1.msra.mxu0 %v2038
        %2096 = vmatprep.subr.mxu0 0.0
        %2097 = vmatpush1.msra.mxu0 0.0
        %2098 = vmatprep.subr.mxu0 0.0
        %2099 = vmatpush1.msra.mxu0 0.0
        %2100 = vmatprep.subr.mxu0 0.0
        %2101 = vmatpush1.msra.mxu0 0.0
        %2102 = vmatprep.subr.mxu0 0.0
        %2103 = vmatpush1.msra.mxu0 0.0
        %2104 = vmatprep.subr.mxu0 0.0
        %2105 = vmatpush1.msra.mxu0 0.0
        %2106 = vmatprep.subr.mxu0 0.0
        %2107 = vmatpush1.msra.mxu0 0.0
        %2108 = vmatprep.subr.mxu0 0.0
        %2109 = vmatpush1.msra.mxu0 0.0
        %2110 = vmatprep.subr.mxu0 0.0
        %2111 = vmatpush1.msra.mxu0 0.0
        %2112 = vmatprep.subr.mxu0 0.0
        %2113 = vmatpush1.msra.mxu0 0.0
        %2114 = vmatprep.subr.mxu0 0.0
        %2115 = vmatpush1.msra.mxu0 0.0
        %2116 = vmatprep.subr.mxu0 0.0
        %2117 = vmatpush1.msra.mxu0 0.0
        %2118 = vmatprep.subr.mxu0 0.0
        %2119 = vmatpush1.msra.mxu0 0.0
        %2120 = vmatprep.subr.mxu0 0.0
        %2121 = vmatpush1.msra.mxu0 0.0
        %2122 = vmatprep.subr.mxu0 0.0
        %2123 = vmatpush1.msra.mxu0 0.0
        %2124 = vmatprep.subr.mxu0 0.0
        %2125 = vmatpush1.msra.mxu0 0.0
        %2126 = vmatprep.subr.mxu0 0.0
        %2127 = vmatpush1.msra.mxu0 0.0
        %2128 = vmatprep.subr.mxu0 0.0
        %2129 = vmatpush1.msra.mxu0 0.0
        %2130 = vmatprep.subr.mxu0 0.0
        %2131 = vmatpush1.msra.mxu0 0.0
        %2132 = vmatprep.subr.mxu0 0.0
        %2133 = vmatpush1.msra.mxu0 0.0
        %2134 = vmatprep.subr.mxu0 0.0
        %2135 = vmatpush1.msra.mxu0 0.0
        %2136 = vmatprep.subr.mxu0 0.0
        %2137 = vmatpush1.msra.mxu0 0.0
        %2138 = vmatprep.subr.mxu0 0.0
        %2139 = vmatpush1.msra.mxu0 0.0
        %2140 = vmatprep.subr.mxu0 0.0
        %2141 = vmatpush1.msra.mxu0 0.0
        %2142 = vmatprep.subr.mxu0 0.0
        %2143 = vmatpush1.msra.mxu0 0.0
        %2144 = vmatprep.subr.mxu0 0.0
        %2145 = vmatpush1.msra.mxu0 0.0
        %2146 = vmatprep.subr.mxu0 0.0
        %2147 = vmatpush1.msra.mxu0 0.0
        %2148 = vmatprep.subr.mxu0 0.0
        %2149 = vmatpush1.msra.mxu0 0.0
        %2150 = vmatprep.subr.mxu0 0.0
        %2151 = vmatpush1.msra.mxu0 0.0
        %2152 = vmatprep.subr.mxu0 0.0
        %2153 = vmatpush1.msra.mxu0 0.0
        %2154 = vmatprep.subr.mxu0 0.0
        %2155 = vmatpush1.msra.mxu0 0.0
        %2156 = vmatprep.subr.mxu0 0.0
        %2157 = vmatpush1.msra.mxu0 0.0
        %2158 = vmatprep.mubr.f32.mxu0 0.0
        %2159 = vmatmul.mubr.f32.gmra.mrb[0].mxu0 %v2047
        %v2160 = vpop.f32.mrb[0].mxu0
        %v2161 = vadd.f32 %v2044, %v2160
        %v2162 = vpop.f32.mrb[0].mxu0
        %2163 = vmatprep.mubr.f32.mxu0 0.0
        %2164 = vmatmul.mubr.f32.gmra.mrb[0].mxu0 %v2050
        %v2165 = vpop.f32.mrb[0].mxu0
        %v2166 = vadd.f32 %v2044, %v2165
        %v2167 = vpop.f32.mrb[0].mxu0
        %2168 = vmatprep.mubr.f32.mxu0 0.0
        %2169 = vmatmul.mubr.f32.gmra.mrb[0].mxu0 %v2053
        %v2170 = vpop.f32.mrb[0].mxu0
        %v2171 = vadd.f32 %v2044, %v2170
        %v2172 = vpop.f32.mrb[0].mxu0
        %2173 = vmatprep.mubr.f32.mxu0 0.0
        %2174 = vmatmul.mubr.f32.gmra.mrb[0].mxu0 %v2056
        %v2175 = vpop.f32.mrb[0].mxu0
        %v2176 = vadd.f32 %v2044, %v2175
        %v2177 = vpop.f32.mrb[0].mxu0
        %2178 = vmatprep.mubr.f32.mxu0 0.0
        %2179 = vmatmul.mubr.f32.gmra.mrb[0].mxu0 %v2059
        %v2180 = vpop.f32.mrb[0].mxu0
        %v2181 = vadd.f32 %v2044, %v2180
        %v2182 = vpop.f32.mrb[0].mxu0
        %2183 = vmatprep.mubr.f32.mxu0 0.0
        %2184 = vmatmul.mubr.f32.gmra.mrb[0].mxu0 %v2062
        %v2185 = vpop.f32.mrb[0].mxu0
        %v2186 = vadd.f32 %v2044, %v2185
        %v2187 = vpop.f32.mrb[0].mxu0
        %2188 = vmatprep.mubr.f32.mxu0 0.0
        %2189 = vmatmul.mubr.f32.gmra.mrb[0].mxu0 %v2065
        %v2190 = vpop.f32.mrb[0].mxu0
        %v2191 = vadd.f32 %v2044, %v2190
        %v2192 = vpop.f32.mrb[0].mxu0
        %2193 = vmatprep.mubr.f32.mxu0 0.0
        %2194 = vmatmul.mubr.f32.gmra.mrb[0].mxu0 %v2068
        %v2195 = vpop.f32.mrb[0].mxu0
        %v2196 = vadd.f32 %v2044, %v2195
        %v2197 = vpop.f32.mrb[0].mxu0
        %2198 = vmatprep.mubr.f32.mxu0 0.0
        %2199 = vmatmul.mubr.f32.gmra.mrb[0].mxu0 %v2071
        %v2200 = vpop.f32.mrb[0].mxu0
        %v2201 = vadd.f32 %v2044, %v2200
        %v2202 = vpop.f32.mrb[0].mxu0
        %2203 = vmatprep.mubr.f32.mxu0 0.0
        %2204 = vmatmul.mubr.f32.gmra.mrb[0].mxu0 %v2074
        %v2205 = vpop.f32.mrb[0].mxu0
        %v2206 = vadd.f32 %v2044, %v2205
        %v2207 = vpop.f32.mrb[0].mxu0
        %2208 = vmatprep.mubr.f32.mxu0 0.0
        %2209 = vmatmul.mubr.f32.gmra.mrb[0].mxu0 %v2077
        %v2210 = vpop.f32.mrb[0].mxu0
        %v2211 = vadd.f32 %v2044, %v2210
        %v2212 = vpop.f32.mrb[0].mxu0
        %2213 = vmatprep.mubr.f32.mxu0 0.0
        %2214 = vmatmul.mubr.f32.gmra.mrb[0].mxu0 %v2080
        %v2215 = vpop.f32.mrb[0].mxu0
        %v2216 = vadd.f32 %v2044, %v2215
        %v2217 = vpop.f32.mrb[0].mxu0
        %2218 = vmatprep.mubr.f32.mxu0 0.0
        %2219 = vmatmul.mubr.f32.gmra.mrb[0].mxu0 %v2083
        %v2220 = vpop.f32.mrb[0].mxu0
        %v2221 = vadd.f32 %v2044, %v2220
        %v2222 = vpop.f32.mrb[0].mxu0
        %2223 = vmatprep.mubr.f32.mxu0 0.0
        %2224 = vmatmul.mubr.f32.gmra.mrb[0].mxu0 %v2086
        %v2225 = vpop.f32.mrb[0].mxu0
        %v2226 = vadd.f32 %v2044, %v2225
        %v2227 = vpop.f32.mrb[0].mxu0
        %2228 = vmatprep.mubr.f32.mxu0 0.0
        %2229 = vmatmul.mubr.f32.gmra.mrb[0].mxu0 %v2089
        %v2230 = vpop.f32.mrb[0].mxu0
        %v2231 = vadd.f32 %v2044, %v2230
        %v2232 = vpop.f32.mrb[0].mxu0
        %2233 = vmatprep.mubr.f32.mxu0 0.0
        %2234 = vmatmul.mubr.f32.gmra.mrb[0].mxu0 %v2092
        %v2235 = vpop.f32.mrb[0].mxu0
        %v2236 = vadd.f32 %v2044, %v2235
        %v2237 = vpop.f32.mrb[0].mxu0
        %2238 = vdwg.mxu0
        %v2239 = vmax.f32 %v2161, 0.0
        %v2240 = vmax.f32 %v2166, 0.0
        %v2241 = vmax.f32 %v2171, 0.0
        %v2242 = vmax.f32 %v2176, 0.0
        %v2243 = vmax.f32 %v2181, 0.0
        %v2244 = vmax.f32 %v2186, 0.0
        %v2245 = vmax.f32 %v2191, 0.0
        %v2246 = vmax.f32 %v2196, 0.0
        %v2247 = vmax.f32 %v2201, 0.0
        %v2248 = vmax.f32 %v2206, 0.0
        %v2249 = vmax.f32 %v2211, 0.0
        %v2250 = vmax.f32 %v2216, 0.0
        %v2251 = vmax.f32 %v2221, 0.0
        %v2252 = vmax.f32 %v2226, 0.0
        %v2253 = vmax.f32 %v2231, 0.0
        %v2254 = vmax.f32 %v2236, 0.0
        %2255 = vst.msk [vmem:[%s387] sm:$0xff] %vm1490, %v2239
        %2256 = vst.msk [vmem:[%s387 + $0x8] sm:$0xff] %vm1490, %v2240
        %2257 = vst.msk [vmem:[%s387 + $0x10] sm:$0xff] %vm1490, %v2241
        %2258 = vst.msk [vmem:[%s387 + $0x18] sm:$0xff] %vm1490, %v2242
        %2259 = vst.msk [vmem:[%s387 + $0x20] sm:$0xff] %vm1490, %v2243
        %2260 = vst.msk [vmem:[%s387 + $0x28] sm:$0xff] %vm1490, %v2244
        %2261 = vst.msk [vmem:[%s387 + $0x30] sm:$0xff] %vm1490, %v2245
        %2262 = vst.msk [vmem:[%s387 + $0x38] sm:$0xff] %vm1490, %v2246
        %2263 = vst.msk [vmem:[%s387 + $0x40] sm:$0xff] %vm1490, %v2247
        %2264 = vst.msk [vmem:[%s387 + $0x48] sm:$0xff] %vm1490, %v2248
        %2265 = vst.msk [vmem:[%s387 + $0x50] sm:$0xff] %vm1490, %v2249
        %2266 = vst.msk [vmem:[%s387 + $0x58] sm:$0xff] %vm1490, %v2250
        %2267 = vst.msk [vmem:[%s387 + $0x60] sm:$0xff] %vm1490, %v2251
        %2268 = vst.msk [vmem:[%s387 + $0x68] sm:$0xff] %vm1490, %v2252
        %2269 = vst.msk [vmem:[%s387 + $0x70] sm:$0xff] %vm1490, %v2253
        %2270 = vst.msk [vmem:[%s387 + $0x78] sm:$0xff] %vm1490, %v2254
        %s2271 = sand.u32 %s201, 1
        %s2272 = scalar_lea.sflag [#allocation5], %s2271
        %s2273 = sand.u32 %s201, 1
        %s2274 = smul.addr %s2273, 128
        %s2275 = scalar_lea.vmem [#allocation15], %s2274
        // Predicated region
        $region85: #{tpu_custom_call.1} parent=47 // pred_check
          %p2276 = pneg %p211
        $region86: #{tpu_custom_call.1} parent=47 // pred_check_branch
          %2278 = sbr.rel (%p2276) target = $region88
        $region87: #{tpu_custom_call.1} parent=47 // pred_region
          %s2279 = smul.u32 8, %s32
          %s2281 = ssub.s32 2048, 2048
          %2282 = vsyncadd %s2272, %s2281
          %s2283 = smul.addr %s2279, 2
          %s2284 = smul.addr %s31, 32
          %s2285 = sadd.s32 %s2283, %s2284
          %s2286 = smul.addr %s2285, 128
          %s2287 = scalar_lea.hbm %s7, %s2286
          %s2288 = sshll.u32 %s2275, 4
          %s2289 = int_to_ptr.vmem [resolvable:$true] %s2288
          %2294 = dma.vmem_to_hbm [thread:$0]  %s2289, 2048, %s2287, %s2272, 128, 128, 8
        $region88: #{tpu_custom_call.1} parent=47 // pred_fallthru
          _
      $region48: #{tpu_custom_call.1} parent=5 // pred_fallthru
        _
      %p2295 = scmp.le.s32.totalorder 2, %s22
      // Predicated region
      $region89: #{tpu_custom_call.1} parent=5 // pred_check
        %p2296 = pneg %p2295
      $region90: #{tpu_custom_call.1} parent=5 // pred_check_branch
        %2298 = sbr.rel (%p2296) target = $region92
      $region91: #{tpu_custom_call.1} parent=5 // pred_region
        %s2299 = ssub.s32 %s22, 2
        // Predicated region
        $region93: #{tpu_custom_call.1} parent=91 // pred_check
          %p2300 = pneg %p217
        $region94: #{tpu_custom_call.1} parent=91 // pred_check_branch
          %2302 = sbr.rel (%p2300) target = $region96
        $region95: #{tpu_custom_call.1} parent=91 // pred_region
          %s2303 = sand.u32 %s202, 1
          %s2304 = scalar_lea.sflag [#allocation5], %s2303
          %s2305 = sand.u32 %s202, 1
          %s2306 = smul.addr %s2305, 128
          %s2307 = scalar_lea.vmem [#allocation15], %s2306
          %2308 = dma.done %s2304, 2048
        $region96: #{tpu_custom_call.1} parent=91 // pred_fallthru
          _
      $region92: #{tpu_custom_call.1} parent=5 // pred_fallthru
        _
    $region6: #{tpu_custom_call.1} parent=1 // loop_footer
      %s26 = sadd.s32 1, %s22
    $region7: #{tpu_custom_call.1} parent=1 // loop_footer_branch
      %21 = sbr.rel target = $region3
    $region8: #{tpu_custom_call.1} parent=1 // loop_exit
      _
    %2309 = vsyncpa [#allocation4], 1
    %s2310 = scalar_lea.sflag [#allocation4], 1
    %2311 = vsyncpa %s2310, 1
    %2312 = vsyncpa [#allocation7], 1
    %2313 = vsyncpa [#allocation10], 1
    %2314 = vsyncpa [#allocation13], 1
    %2315 = vsyncpa [#allocation5], 1
    %s2316 = scalar_lea.sflag [#allocation5], 1
    %2317 = vsyncpa %s2316, 1

</llo_original>
